<compile_context>
chip_gen: v7x
topology: tpu7x:2x2x1
jax: 0.10.0
libtpu: 0.0.40
codegen_flags: <defaults>
</compile_context>

<pallas_src>
import functools

import jax
import jax.numpy as jnp
from jax.experimental import pallas as pl
from jax.experimental.pallas import tpu as pltpu


def _round_up(v: int, mult: int) -> int:
    return ((v + mult - 1) // mult) * mult


def _pick_tile(size: int, cap: int) -> int:
    """Largest power-of-two multiple of 128 that is <= min(size, cap)."""
    t = 128
    while t * 2 <= min(size, cap):
        t *= 2
    return t


def _vmem_limit(nbytes: int) -> int:
    # Modest scoped-VMEM request with headroom; stays well under v7x's 64 MiB.
    return int(min(40 * 1024 * 1024, max(16 * 1024 * 1024, 2 * nbytes + (2 << 20))))


# ---------------------------------------------------------------------------
# Pass 1: per-relation feature projection  XW[r] = X @ W_r   (W pre-transposed)
# ---------------------------------------------------------------------------
def _project_kernel(x_ref, w_ref, xw_ref, acc_ref):
    # grid = (R, n_tiles, k_tiles); k (feat_in) is the reduction axis.
    k = pl.program_id(2)
    part = jnp.dot(x_ref[...], w_ref[...], preferred_element_type=jnp.float32)

    @pl.when(k == 0)
    def _():
        acc_ref[...] = part          # direct write, no zero-init + RMW

    @pl.when(k > 0)
    def _():
        acc_ref[...] += part

    @pl.when(k == pl.num_programs(2) - 1)
    def _():
        xw_ref[0] = acc_ref[...].astype(xw_ref.dtype)


def _project(x_p, wt_p, *, tn, tk):
    """x_p: (pnodes, fin_p) bf16; wt_p: (R, fin_p, fout_p) bf16 -> (R, pnodes, fout_p) bf16."""
    pnodes, fin_p = x_p.shape
    num_rels, fin_p2, fout_p = wt_p.shape
    assert fin_p2 == fin_p
    grid = (num_rels, pnodes // tn, fin_p // tk)

    flops = 2 * num_rels * pnodes * fin_p * fout_p
    bytes_accessed = (num_rels * pnodes * fin_p * 2          # X re-read per relation
                      + grid[1] * num_rels * fin_p * fout_p * 2
                      + num_rels * pnodes * fout_p * 2)
    vmem = (2 * tn * tk * 2 + 2 * tk * fout_p * 2
            + 2 * tn * fout_p * 2 + tn * fout_p * 4)

    return pl.pallas_call(
        _project_kernel,
        out_shape=jax.ShapeDtypeStruct((num_rels, pnodes, fout_p), jnp.bfloat16),
        grid_spec=pltpu.PrefetchScalarGridSpec(
            num_scalar_prefetch=0,
            grid=grid,
            in_specs=[
                pl.BlockSpec((tn, tk), lambda r, jn, k: (jn, k)),
                pl.BlockSpec((pl.Squeezed(), tk, fout_p),
                             lambda r, jn, k: (r, k, 0)),
            ],
            out_specs=pl.BlockSpec((1, tn, fout_p), lambda r, jn, k: (r, jn, 0)),
            scratch_shapes=[pltpu.VMEM((tn, fout_p), jnp.float32)],
        ),
        compiler_params=pltpu.CompilerParams(
            dimension_semantics=("parallel", "parallel", "arbitrary"),
            vmem_limit_bytes=_vmem_limit(vmem),
        ),
        cost_estimate=pl.CostEstimate(flops=flops, transcendentals=0,
                                      bytes_accessed=bytes_accessed),
    )(x_p, wt_p)


# ---------------------------------------------------------------------------
# Pass 2: aggregation  Y = sum_r A_r @ XW_r   (+ fused ReLU)
# ---------------------------------------------------------------------------
def _aggregate_kernel(a_ref, xw_ref, y_ref, acc_ref, *, apply_relu):
    # grid = (m_tiles, R, n_tiles); r and n are reduction axes, output resident.
    r = pl.program_id(1)
    jn = pl.program_id(2)
    is_first = jnp.logical_and(r == 0, jn == 0)
    is_last = jnp.logical_and(r == pl.num_programs(1) - 1,
                              jn == pl.num_programs(2) - 1)

    # bf16 x bf16 -> f32 accumulate: single MXU pass on v5e/v6e/v7x.
    part = jnp.dot(a_ref[...], xw_ref[...], preferred_element_type=jnp.float32)

    @pl.when(is_first)
    def _():
        acc_ref[...] = part

    @pl.when(jnp.logical_not(is_first))
    def _():
        acc_ref[...] += part

    @pl.when(is_last)
    def _():
        out = acc_ref[...]
        if apply_relu:
            out = jnp.maximum(out, 0.0)
        y_ref[...] = out.astype(y_ref.dtype)


def _aggregate(adj_p, xw_p, *, tm, tn, apply_relu, out_dtype):
    """adj_p: (R, pnodes, pnodes) bf16; xw_p: (R, pnodes, fout_p) bf16 -> (pnodes, fout_p)."""
    num_rels, mp, npad = adj_p.shape
    fout_p = xw_p.shape[2]
    grid = (mp // tm, num_rels, npad // tn)

    out_bytes = jnp.dtype(out_dtype).itemsize
    flops = 2 * num_rels * mp * npad * fout_p
    bytes_accessed = (num_rels * mp * npad * 2
                      + grid[0] * num_rels * npad * fout_p * 2
                      + mp * fout_p * out_bytes)
    vmem = (2 * tm * tn * 2 + 2 * tn * fout_p * 2
            + 2 * tm * fout_p * out_bytes + tm * fout_p * 4)

    kernel = functools.partial(_aggregate_kernel, apply_relu=apply_relu)
    return pl.pallas_call(
        kernel,
        out_shape=jax.ShapeDtypeStruct((mp, fout_p), out_dtype),
        grid_spec=pltpu.PrefetchScalarGridSpec(
            num_scalar_prefetch=0,
            grid=grid,
            in_specs=[
                # TODO(synk): sweep pipeline_mode=pl.Buffered(3) on this A spec once a
                # profile confirms exposed DMA on the A stream (costs extra VMEM on v7x).
                pl.BlockSpec((pl.Squeezed(), tm, tn),
                             lambda i, r, jn: (r, i, jn)),
                pl.BlockSpec((pl.Squeezed(), tn, fout_p),
                             lambda i, r, jn: (r, jn, 0)),
            ],
            out_specs=pl.BlockSpec((tm, fout_p), lambda i, r, jn: (i, 0)),
            scratch_shapes=[pltpu.VMEM((tm, fout_p), jnp.float32)],
        ),
        compiler_params=pltpu.CompilerParams(
            dimension_semantics=("parallel", "arbitrary", "arbitrary"),
            vmem_limit_bytes=_vmem_limit(vmem),
        ),
        cost_estimate=pl.CostEstimate(flops=flops, transcendentals=0,
                                      bytes_accessed=bytes_accessed),
    )(adj_p, xw_p)


# ---------------------------------------------------------------------------
# Full module forward: layer2(relu(layer1(features)))
# ---------------------------------------------------------------------------
@jax.jit
def rgcn_two_layer_forward(adj, feat, w1, w2):
    """adj: (R, m, n) f32 edge counts; feat: (n, f_in) f32;
    w1: (R, hid, f_in) f32; w2: (R, f_out, hid) f32 -> (m, f_out) f32."""
    num_rels, m, n = adj.shape
    f_in = feat.shape[1]
    hid = w1.shape[1]
    f_out = w2.shape[1]
    assert m == n, "two-layer RGCN reuses the same graph: needs num_dst == num_src"
    assert w1.shape == (num_rels, hid, f_in)
    assert w2.shape == (num_rels, f_out, hid)

    # --- static tiling / padding decisions (lane = 128) ---
    pnodes = _round_up(n, 128)
    tn = _pick_tile(pnodes, 1024)        # source-node tile (lane dim of A)
    tm = _pick_tile(pnodes, 256)         # dst-node tile (rows of Y)
    pnodes = _round_up(pnodes, max(tm, tn))
    if pnodes // tm < 2 and tm > 128:
        tm //= 2                         # >= 2 m-tiles so both v7x TensorCores get work

    fin_p = _round_up(f_in, 128)
    tk1 = _pick_tile(fin_p, 512)         # f_in tiled so X blocks stay bounded (v7x VMEM)
    fin_p = _round_up(fin_p, tk1)

    fh_p = _round_up(hid, 128)
    tk2 = _pick_tile(fh_p, 512)
    fh_p = _round_up(fh_p, tk2)

    fo_p = _round_up(f_out, 128)

    # --- pad + cast once (bf16 operands, f32 accumulation inside the kernels).
    # bf16 edge multiplicities are exact for <= 256 duplicate edges per (r,i,j).
    adj_p = jnp.pad(adj.astype(jnp.bfloat16),
                    ((0, 0), (0, pnodes - m), (0, pnodes - n)))
    x_p = jnp.pad(feat.astype(jnp.bfloat16),
                  ((0, pnodes - n), (0, fin_p - f_in)))
    # Pre-transposed weights (R, f_in, f_out): projection is a plain NN matmul,
    # W lane dim = f_out, no per-step transpose/relayout in the kernel.
    w1t = jnp.pad(jnp.transpose(w1, (0, 2, 1)),
                  ((0, 0), (0, fin_p - f_in), (0, fh_p - hid))).astype(jnp.bfloat16)
    w2t = jnp.pad(jnp.transpose(w2, (0, 2, 1)),
                  ((0, 0), (0, fh_p - hid), (0, fo_p - f_out))).astype(jnp.bfloat16)

    # --- layer 1:  H = relu(sum_r A_r @ (X @ W1_r^T)) ---
    xw1 = _project(x_p, w1t, tn=tn, tk=tk1)                       # (R, pnodes, fh_p) bf16
    h_p = _aggregate(adj_p, xw1, tm=tm, tn=tn, apply_relu=True,
                     out_dtype=jnp.bfloat16)                      # stays padded for layer 2

    # --- layer 2:  Y = sum_r A_r @ (H @ W2_r^T) ---
    xw2 = _project(h_p, w2t, tn=tn, tk=tk2)                       # (R, pnodes, fo_p) bf16
    y_p = _aggregate(adj_p, xw2, tm=tm, tn=tn, apply_relu=False,
                     out_dtype=jnp.float32)

    return y_p[:m, :f_out]


if __name__ == "__main__":
    # Small synthetic heterogeneous graph (m == n so layer2 can reuse layer1's
    # output as node features, as in the DGL module).
    num_rels = 3
    num_nodes = 64
    in_dim = 32
    hidden_dim = 16
    out_dim = 8
    edges_per_rel = 200

    key = jax.random.PRNGKey(0)
    k_w1, k_w2, k_x, k_dst, k_src = jax.random.split(key, 5)

    # nn.Parameter(torch.Tensor(...)) is uninitialized in the module; use a
    # fixed scaled-normal init instead (deterministic).
    W1 = (jax.random.normal(k_w1, (num_rels, hidden_dim, in_dim), jnp.float32)
          / jnp.sqrt(in_dim))
    W2 = (jax.random.normal(k_w2, (num_rels, out_dim, hidden_dim), jnp.float32)
          / jnp.sqrt(hidden_dim))
    X = jax.random.normal(k_x, (num_nodes, in_dim), jnp.float32)

    # Random per-relation edge lists -> dense per-relation adjacency with
    # per-edge value 1.0 (duplicate edges accumulate, matching the sparse sum).
    dst_ids = jax.random.randint(k_dst, (num_rels, edges_per_rel), 0, num_nodes)
    src_ids = jax.random.randint(k_src, (num_rels, edges_per_rel), 0, num_nodes)
    rel_ids = jnp.repeat(jnp.arange(num_rels), edges_per_rel)
    A = jnp.zeros((num_rels, num_nodes, num_nodes), jnp.float32)
    A = A.at[rel_ids, dst_ids.reshape(-1), src_ids.reshape(-1)].add(1.0)
    # Guard the bf16-adjacency exactness assumption (edge multiplicity <= 256).
    assert float(A.max()) <= 256.0

    y = rgcn_two_layer_forward(A, X, W1, W2)
    y = jax.block_until_ready(y)

    # Pure-JAX f32 HIGHEST-precision reference for self-check.
    hp = jax.lax.Precision.HIGHEST
    h_ref = jnp.maximum(jnp.einsum("rmn,nf,rof->mo", A, X, W1, precision=hp), 0.0)
    y_ref = jnp.einsum("rmn,nf,rof->mo", A, h_ref, W2, precision=hp)

    assert y.shape == (num_nodes, out_dim)
    err = float(jnp.max(jnp.abs(y - y_ref)))
    scale = float(jnp.max(jnp.abs(y_ref)))
    # bf16 operands with f32 accumulation through two layers: validate relative
    # to the output scale (tolerance re-derived per the bf16 error budget).
    assert err <= 2e-2 * max(scale, 1.0), (
        f"mismatch: max abs err={err}, output scale={scale}")

    print("KERNEL_OK")
</pallas_src>

<mosaic_0001>
module attributes {stable_mosaic.version = 11 : i64} {
  func.func @_project_kernel(%arg0: i32, %arg1: i32, %arg2: i32, %arg3: memref<128x128xbf16, #tpu.memory_space<vmem>>, %arg4: memref<1x128x128xbf16, #tpu.memory_space<vmem>>, %arg5: memref<1x128x128xbf16, #tpu.memory_space<vmem>>, %arg6: memref<128x128xf32, #tpu.memory_space<vmem>>) attributes {dimension_semantics = [#tpu.dimension_semantics<parallel>, #tpu.dimension_semantics<parallel>, #tpu.dimension_semantics<arbitrary>], iteration_bounds = array<i64: 3, 1, 1>, scalar_prefetch = 0 : i64, scratch_operands = 1 : i64, tpu.core_type = #tpu.core_type<tc>, window_params = [{transform_indices = @transform_0, window_bounds = array<i64: 128, 128>}, {transform_indices = @transform_1, window_bounds = array<i64: 1, 128, 128>}, {transform_indices = @transform_2, window_bounds = array<i64: 1, 128, 128>}]} {
    %c0 = arith.constant 0 : index
    %c0_0 = arith.constant 0 : index
    %0 = vector.load %arg3[%c0, %c0_0] : memref<128x128xbf16, #tpu.memory_space<vmem>>, vector<128x128xbf16>
    %c0_1 = arith.constant 0 : index
    %c0_2 = arith.constant 0 : index
    %c0_3 = arith.constant 0 : index
    %1 = vector.load %arg4[%c0_1, %c0_2, %c0_3] : memref<1x128x128xbf16, #tpu.memory_space<vmem>>, vector<1x128x128xbf16>
    %2 = vector.shape_cast %1 : vector<1x128x128xbf16> to vector<128x128xbf16>
    %cst = arith.constant dense<0.000000e+00> : vector<128x128xf32>
    %3 = tpu.matmul %0, %2, %cst {dimension_numbers = #tpu.dot_dimension_numbers<[1], [0], [0], [1], [0, 0, 1, 1], [], []>} : vector<128x128xbf16>, vector<128x128xbf16>, vector<128x128xf32> -> vector<128x128xf32>
    %c0_i32 = arith.constant 0 : i32
    %4 = arith.cmpi eq, %arg2, %c0_i32 : i32
    %5 = arith.extui %4 : i1 to i32
    %c0_i32_4 = arith.constant 0 : i32
    %6 = arith.cmpi ne, %5, %c0_i32_4 : i32
    scf.if %6 {
      %c0_9 = arith.constant 0 : index
      %c0_10 = arith.constant 0 : index
      %13 = vector.load %arg6[%c0_9, %c0_10] : memref<128x128xf32, #tpu.memory_space<vmem>>, vector<128x128xf32>
      tpu.vector_store %arg6[%c0_9, %c0_10], %3 {strides = array<i32>} : memref<128x128xf32, #tpu.memory_space<vmem>>, vector<128x128xf32>,
    } else {
    }
    %c0_i32_5 = arith.constant 0 : i32
    %7 = arith.cmpi sgt, %arg2, %c0_i32_5 : i32
    %8 = arith.extui %7 : i1 to i32
    %c0_i32_6 = arith.constant 0 : i32
    %9 = arith.cmpi ne, %8, %c0_i32_6 : i32
    scf.if %9 {
      %c0_9 = arith.constant 0 : index
      %c0_10 = arith.constant 0 : index
      %13 = vector.load %arg6[%c0_9, %c0_10] : memref<128x128xf32, #tpu.memory_space<vmem>>, vector<128x128xf32>
      %14 = arith.addf %13, %3 : vector<128x128xf32>
      %c0_11 = arith.constant 0 : index
      %c0_12 = arith.constant 0 : index
      %15 = vector.load %arg6[%c0_11, %c0_12] : memref<128x128xf32, #tpu.memory_space<vmem>>, vector<128x128xf32>
      tpu.vector_store %arg6[%c0_11, %c0_12], %14 {strides = array<i32>} : memref<128x128xf32, #tpu.memory_space<vmem>>, vector<128x128xf32>,
    } else {
    }
    %c0_i32_7 = arith.constant 0 : i32
    %10 = arith.cmpi eq, %arg2, %c0_i32_7 : i32
    %11 = arith.extui %10 : i1 to i32
    %c0_i32_8 = arith.constant 0 : i32
    %12 = arith.cmpi ne, %11, %c0_i32_8 : i32
    scf.if %12 {
      %c0_9 = arith.constant 0 : index
      %c0_10 = arith.constant 0 : index
      %13 = vector.load %arg6[%c0_9, %c0_10] : memref<128x128xf32, #tpu.memory_space<vmem>>, vector<128x128xf32>
      %14 = arith.truncf %13 : vector<128x128xf32> to vector<128x128xbf16>
      %c0_11 = arith.constant 0 : index
      %c0_12 = arith.constant 0 : index
      %c0_13 = arith.constant 0 : index
      %15 = vector.load %arg5[%c0_11, %c0_12, %c0_13] : memref<1x128x128xbf16, #tpu.memory_space<vmem>>, vector<1x128x128xbf16>
      %16 = vector.shape_cast %15 : vector<1x128x128xbf16> to vector<128x128xbf16>
      %17 = vector.shape_cast %14 : vector<128x128xbf16> to vector<1x128x128xbf16>
      tpu.vector_store %arg5[%c0_11, %c0_12, %c0_13], %17 {strides = array<i32>} : memref<1x128x128xbf16, #tpu.memory_space<vmem>>, vector<1x128x128xbf16>,
    } else {
    }
    return
  }
  func.func @transform_0(%arg0: i32, %arg1: i32, %arg2: i32) -> (i32, i32) {
    %c0_i32 = arith.constant 0 : i32
    return %arg1, %arg2 : i32, i32
  }
  func.func @transform_1(%arg0: i32, %arg1: i32, %arg2: i32) -> (i32, i32, i32) {
    %c0_i32 = arith.constant 0 : i32
    %c0_i32_0 = arith.constant 0 : i32
    return %arg0, %arg2, %c0_i32 : i32, i32, i32
  }
  func.func @transform_2(%arg0: i32, %arg1: i32, %arg2: i32) -> (i32, i32, i32) {
    %c0_i32 = arith.constant 0 : i32
    %c0_i32_0 = arith.constant 0 : i32
    return %arg0, %arg1, %c0_i32 : i32, i32, i32
  }
}

module attributes {stable_mosaic.version = 11 : i64} {
  func.func @_aggregate_kernel(%arg0: i32, %arg1: i32, %arg2: i32, %arg3: memref<1x128x128xbf16, #tpu.memory_space<vmem>>, %arg4: memref<1x128x128xbf16, #tpu.memory_space<vmem>>, %arg5: memref<128x128xbf16, #tpu.memory_space<vmem>>, %arg6: memref<128x128xf32, #tpu.memory_space<vmem>>) attributes {dimension_semantics = [#tpu.dimension_semantics<parallel>, #tpu.dimension_semantics<arbitrary>, #tpu.dimension_semantics<arbitrary>], iteration_bounds = array<i64: 1, 3, 1>, scalar_prefetch = 0 : i64, scratch_operands = 1 : i64, tpu.core_type = #tpu.core_type<tc>, window_params = [{transform_indices = @transform_0, window_bounds = array<i64: 1, 128, 128>}, {transform_indices = @transform_1, window_bounds = array<i64: 1, 128, 128>}, {transform_indices = @transform_2, window_bounds = array<i64: 128, 128>}]} {
    %c0_i32 = arith.constant 0 : i32
    %0 = arith.cmpi eq, %arg1, %c0_i32 : i32
    %c0_i32_0 = arith.constant 0 : i32
    %1 = arith.cmpi eq, %arg2, %c0_i32_0 : i32
    %2 = arith.andi %0, %1 : i1
    %c2_i32 = arith.constant 2 : i32
    %3 = arith.cmpi eq, %arg1, %c2_i32 : i32
    %c0_i32_1 = arith.constant 0 : i32
    %4 = arith.cmpi eq, %arg2, %c0_i32_1 : i32
    %5 = arith.andi %3, %4 : i1
    %c0 = arith.constant 0 : index
    %c0_2 = arith.constant 0 : index
    %c0_3 = arith.constant 0 : index
    %6 = vector.load %arg3[%c0, %c0_2, %c0_3] : memref<1x128x128xbf16, #tpu.memory_space<vmem>>, vector<1x128x128xbf16>
    %7 = vector.shape_cast %6 : vector<1x128x128xbf16> to vector<128x128xbf16>
    %c0_4 = arith.constant 0 : index
    %c0_5 = arith.constant 0 : index
    %c0_6 = arith.constant 0 : index
    %8 = vector.load %arg4[%c0_4, %c0_5, %c0_6] : memref<1x128x128xbf16, #tpu.memory_space<vmem>>, vector<1x128x128xbf16>
    %9 = vector.shape_cast %8 : vector<1x128x128xbf16> to vector<128x128xbf16>
    %cst = arith.constant dense<0.000000e+00> : vector<128x128xf32>
    %10 = tpu.matmul %7, %9, %cst {dimension_numbers = #tpu.dot_dimension_numbers<[1], [0], [0], [1], [0, 0, 1, 1], [], []>} : vector<128x128xbf16>, vector<128x128xbf16>, vector<128x128xf32> -> vector<128x128xf32>
    %11 = arith.extui %2 : i1 to i32
    %c0_i32_7 = arith.constant 0 : i32
    %12 = arith.cmpi ne, %11, %c0_i32_7 : i32
    scf.if %12 {
      %c0_10 = arith.constant 0 : index
      %c0_11 = arith.constant 0 : index
      %18 = vector.load %arg6[%c0_10, %c0_11] : memref<128x128xf32, #tpu.memory_space<vmem>>, vector<128x128xf32>
      tpu.vector_store %arg6[%c0_10, %c0_11], %10 {strides = array<i32>} : memref<128x128xf32, #tpu.memory_space<vmem>>, vector<128x128xf32>,
    } else {
    }
    %true = arith.constant true
    %13 = arith.xori %2, %true : i1
    %14 = arith.extui %13 : i1 to i32
    %c0_i32_8 = arith.constant 0 : i32
    %15 = arith.cmpi ne, %14, %c0_i32_8 : i32
    scf.if %15 {
      %c0_10 = arith.constant 0 : index
      %c0_11 = arith.constant 0 : index
      %18 = vector.load %arg6[%c0_10, %c0_11] : memref<128x128xf32, #tpu.memory_space<vmem>>, vector<128x128xf32>
      %19 = arith.addf %18, %10 : vector<128x128xf32>
      %c0_12 = arith.constant 0 : index
      %c0_13 = arith.constant 0 : index
      %20 = vector.load %arg6[%c0_12, %c0_13] : memref<128x128xf32, #tpu.memory_space<vmem>>, vector<128x128xf32>
      tpu.vector_store %arg6[%c0_12, %c0_13], %19 {strides = array<i32>} : memref<128x128xf32, #tpu.memory_space<vmem>>, vector<128x128xf32>,
    } else {
    }
    %16 = arith.extui %5 : i1 to i32
    %c0_i32_9 = arith.constant 0 : i32
    %17 = arith.cmpi ne, %16, %c0_i32_9 : i32
    scf.if %17 {
      %c0_10 = arith.constant 0 : index
      %c0_11 = arith.constant 0 : index
      %18 = vector.load %arg6[%c0_10, %c0_11] : memref<128x128xf32, #tpu.memory_space<vmem>>, vector<128x128xf32>
      %cst_12 = arith.constant 0.000000e+00 : f32
      %19 = vector.broadcast %cst_12 : f32 to vector<128x128xf32>
      %20 = arith.maximumf %18, %19 : vector<128x128xf32>
      %21 = arith.truncf %20 : vector<128x128xf32> to vector<128x128xbf16>
      %c0_13 = arith.constant 0 : index
      %c0_14 = arith.constant 0 : index
      %22 = vector.load %arg5[%c0_13, %c0_14] : memref<128x128xbf16, #tpu.memory_space<vmem>>, vector<128x128xbf16>
      tpu.vector_store %arg5[%c0_13, %c0_14], %21 {strides = array<i32>} : memref<128x128xbf16, #tpu.memory_space<vmem>>, vector<128x128xbf16>,
    } else {
    }
    return
  }
  func.func @transform_0(%arg0: i32, %arg1: i32, %arg2: i32) -> (i32, i32, i32) {
    %c0_i32 = arith.constant 0 : i32
    return %arg1, %arg0, %arg2 : i32, i32, i32
  }
  func.func @transform_1(%arg0: i32, %arg1: i32, %arg2: i32) -> (i32, i32, i32) {
    %c0_i32 = arith.constant 0 : i32
    %c0_i32_0 = arith.constant 0 : i32
    return %arg1, %arg2, %c0_i32 : i32, i32, i32
  }
  func.func @transform_2(%arg0: i32, %arg1: i32, %arg2: i32) -> (i32, i32) {
    %c0_i32 = arith.constant 0 : i32
    %c0_i32_0 = arith.constant 0 : i32
    return %arg0, %c0_i32 : i32, i32
  }
}

module attributes {stable_mosaic.version = 11 : i64} {
  func.func @_aggregate_kernel(%arg0: i32, %arg1: i32, %arg2: i32, %arg3: memref<1x128x128xbf16, #tpu.memory_space<vmem>>, %arg4: memref<1x128x128xbf16, #tpu.memory_space<vmem>>, %arg5: memref<128x128xf32, #tpu.memory_space<vmem>>, %arg6: memref<128x128xf32, #tpu.memory_space<vmem>>) attributes {dimension_semantics = [#tpu.dimension_semantics<parallel>, #tpu.dimension_semantics<arbitrary>, #tpu.dimension_semantics<arbitrary>], iteration_bounds = array<i64: 1, 3, 1>, scalar_prefetch = 0 : i64, scratch_operands = 1 : i64, tpu.core_type = #tpu.core_type<tc>, window_params = [{transform_indices = @transform_0, window_bounds = array<i64: 1, 128, 128>}, {transform_indices = @transform_1, window_bounds = array<i64: 1, 128, 128>}, {transform_indices = @transform_2, window_bounds = array<i64: 128, 128>}]} {
    %c0_i32 = arith.constant 0 : i32
    %0 = arith.cmpi eq, %arg1, %c0_i32 : i32
    %c0_i32_0 = arith.constant 0 : i32
    %1 = arith.cmpi eq, %arg2, %c0_i32_0 : i32
    %2 = arith.andi %0, %1 : i1
    %c2_i32 = arith.constant 2 : i32
    %3 = arith.cmpi eq, %arg1, %c2_i32 : i32
    %c0_i32_1 = arith.constant 0 : i32
    %4 = arith.cmpi eq, %arg2, %c0_i32_1 : i32
    %5 = arith.andi %3, %4 : i1
    %c0 = arith.constant 0 : index
    %c0_2 = arith.constant 0 : index
    %c0_3 = arith.constant 0 : index
    %6 = vector.load %arg3[%c0, %c0_2, %c0_3] : memref<1x128x128xbf16, #tpu.memory_space<vmem>>, vector<1x128x128xbf16>
    %7 = vector.shape_cast %6 : vector<1x128x128xbf16> to vector<128x128xbf16>
    %c0_4 = arith.constant 0 : index
    %c0_5 = arith.constant 0 : index
    %c0_6 = arith.constant 0 : index
    %8 = vector.load %arg4[%c0_4, %c0_5, %c0_6] : memref<1x128x128xbf16, #tpu.memory_space<vmem>>, vector<1x128x128xbf16>
    %9 = vector.shape_cast %8 : vector<1x128x128xbf16> to vector<128x128xbf16>
    %cst = arith.constant dense<0.000000e+00> : vector<128x128xf32>
    %10 = tpu.matmul %7, %9, %cst {dimension_numbers = #tpu.dot_dimension_numbers<[1], [0], [0], [1], [0, 0, 1, 1], [], []>} : vector<128x128xbf16>, vector<128x128xbf16>, vector<128x128xf32> -> vector<128x128xf32>
    %11 = arith.extui %2 : i1 to i32
    %c0_i32_7 = arith.constant 0 : i32
    %12 = arith.cmpi ne, %11, %c0_i32_7 : i32
    scf.if %12 {
      %c0_10 = arith.constant 0 : index
      %c0_11 = arith.constant 0 : index
      %18 = vector.load %arg6[%c0_10, %c0_11] : memref<128x128xf32, #tpu.memory_space<vmem>>, vector<128x128xf32>
      tpu.vector_store %arg6[%c0_10, %c0_11], %10 {strides = array<i32>} : memref<128x128xf32, #tpu.memory_space<vmem>>, vector<128x128xf32>,
    } else {
    }
    %true = arith.constant true
    %13 = arith.xori %2, %true : i1
    %14 = arith.extui %13 : i1 to i32
    %c0_i32_8 = arith.constant 0 : i32
    %15 = arith.cmpi ne, %14, %c0_i32_8 : i32
    scf.if %15 {
      %c0_10 = arith.constant 0 : index
      %c0_11 = arith.constant 0 : index
      %18 = vector.load %arg6[%c0_10, %c0_11] : memref<128x128xf32, #tpu.memory_space<vmem>>, vector<128x128xf32>
      %19 = arith.addf %18, %10 : vector<128x128xf32>
      %c0_12 = arith.constant 0 : index
      %c0_13 = arith.constant 0 : index
      %20 = vector.load %arg6[%c0_12, %c0_13] : memref<128x128xf32, #tpu.memory_space<vmem>>, vector<128x128xf32>
      tpu.vector_store %arg6[%c0_12, %c0_13], %19 {strides = array<i32>} : memref<128x128xf32, #tpu.memory_space<vmem>>, vector<128x128xf32>,
    } else {
    }
    %16 = arith.extui %5 : i1 to i32
    %c0_i32_9 = arith.constant 0 : i32
    %17 = arith.cmpi ne, %16, %c0_i32_9 : i32
    scf.if %17 {
      %c0_10 = arith.constant 0 : index
      %c0_11 = arith.constant 0 : index
      %18 = vector.load %arg6[%c0_10, %c0_11] : memref<128x128xf32, #tpu.memory_space<vmem>>, vector<128x128xf32>
      %c0_12 = arith.constant 0 : index
      %c0_13 = arith.constant 0 : index
      %19 = vector.load %arg5[%c0_12, %c0_13] : memref<128x128xf32, #tpu.memory_space<vmem>>, vector<128x128xf32>
      tpu.vector_store %arg5[%c0_12, %c0_13], %18 {strides = array<i32>} : memref<128x128xf32, #tpu.memory_space<vmem>>, vector<128x128xf32>,
    } else {
    }
    return
  }
  func.func @transform_0(%arg0: i32, %arg1: i32, %arg2: i32) -> (i32, i32, i32) {
    %c0_i32 = arith.constant 0 : i32
    return %arg1, %arg0, %arg2 : i32, i32, i32
  }
  func.func @transform_1(%arg0: i32, %arg1: i32, %arg2: i32) -> (i32, i32, i32) {
    %c0_i32 = arith.constant 0 : i32
    %c0_i32_0 = arith.constant 0 : i32
    return %arg1, %arg2, %c0_i32 : i32, i32, i32
  }
  func.func @transform_2(%arg0: i32, %arg1: i32, %arg2: i32) -> (i32, i32) {
    %c0_i32 = arith.constant 0 : i32
    %c0_i32_0 = arith.constant 0 : i32
    return %arg0, %c0_i32 : i32, i32
  }
}

</mosaic_0001>

<llo_original>
// kernel: rgcn_two_layer_forward.7
$region0: #{rgcn_two_layer_forward.7}
  #allocation0 [shape = 'u32[]', space=smem, size = 0x4, offset = 0x4, fixed_abs, tag = 'smem constant byte address 0x4 - core index']
  #allocation1 [shape = 'u32[144,128]{1,0:T(1,128)}', space=vmem, size = 0x12000, scoped, tag = 'internal scratch']
  #allocation2 [shape = 'f32[128,128]{1,0:T(8,128)}', space=vmem, size = 0x10000, scoped, tag = 'scratch operand']
  %s0 = inlined_call_operand.vmem [shape: bf16[3,128,128], index: 0, kind: input, shape index: {}]
  %s1 = inlined_call_operand.vmem [shape: bf16[3,128,128], index: 1, kind: input, shape index: {}]
  %s2 = inlined_call_operand.vmem [shape: f32[128,128], index: 2, kind: output, shape index: {}]
  %s3 = sld [smem:[#allocation0]]
  $region53: #{rgcn_two_layer_forward.7} parent=0
    _
  %s5 = ssub.s32 1, %s3
  %s6 = scalar_select 0, %s5, %s3
  loop: start=0, step=1, limit=5
  $region2: #{rgcn_two_layer_forward.7} parent=0 // loop_pre_header
    _
  $region3: #{rgcn_two_layer_forward.7} parent=0 // loop_header
    %s8 = sphi 0, %s12
    %p9 = scmp.ge.s32.totalorder %s8, 5
    %s15 = sphi 0, %s34
    %s16 = sphi 0, %s30
    %s17 = sphi 0, %s26
    %s18 = sphi 0, %s15
    %s19 = sphi 0, %s16
    %s20 = sphi 0, %s17
    %s21 = sphi 0, %s18
    %s22 = sphi 0, %s19
    %s23 = sphi 0, %s20
    %s41 = sphi 0, %s43
    %s44 = sphi 0, %s41
    %s45 = sphi 0, %s44
    %s61 = sphi 0, %s45
    %s69 = sphi 0, %s71
    %s72 = sphi 0, %s69
    %s73 = sphi 0, %s72
    %s89 = sphi 0, %s73
    %s95 = sphi 0, %s97
    %s98 = sphi 0, %s95
    %s99 = sphi 0, %s98
    %s115 = sphi 0, %s99
  $region4: #{rgcn_two_layer_forward.7} parent=0 // loop_header_branch
    %11 = sbr.rel (%p9) target = $region8
  $region5: #{rgcn_two_layer_forward.7} parent=0 // loop_body
    %s13 = ssub.s32 %s8, 1
    %s14 = ssub.s32 %s8, 2
    %s24 = sadd.s32 1, %s17
    %p25 = scmp.ge.s32.totalorder %s24, 1
    %s26 = scalar_select %p25, 0, %s24
    %s27 = sadd.s32 1, %s16
    %s28 = scalar_select %p25, %s27, %s16
    %p29 = scmp.ge.s32.totalorder %s28, 3
    %s30 = scalar_select %p29, 0, %s28
    %s31 = sadd.s32 1, %s15
    %s32 = scalar_select %p29, %s31, %s15
    %p33 = scmp.ge.s32.totalorder %s32, 1
    %s34 = scalar_select %p33, 0, %s32
    %s35 = ssub.s32 %s16, %s30
    %s36 = ssub.s32 %s15, %s34
    %s37 = sor.u32 %s35, %s36
    %s38 = ssub.s32 %s17, %s26
    %s39 = sor.u32 %s37, %s38
    %p40 = scmp.eq.s32.totalorder %s39, 0
    %s42 = sadd.s32 %s41, 1
    %s43 = scalar_select %p40, %s41, %s42
    %p46 = pneg %p40
    %p47 = scmp.eq.s32.totalorder %s8, 2
    %p48 = por %p46, %p47
    %p49 = scmp.ne.s32.totalorder %s41, %s44
    %p50 = scmp.eq.s32.totalorder %s8, 0
    %p51 = por %p49, %p50
    %p52 = scmp.ne.s32.totalorder %s41, %s44
    %p53 = scmp.eq.s32.totalorder %s13, 2
    %p54 = por %p52, %p53
    %p55 = scmp.ne.s32.totalorder %s44, %s45
    %p56 = scmp.eq.s32.totalorder %s13, 0
    %p57 = por %p55, %p56
    %p58 = scmp.ne.s32.totalorder %s44, %s45
    %p59 = scmp.eq.s32.totalorder %s14, 2
    %p60 = por %p58, %p59
    %p62 = scmp.ne.s32.totalorder %s45, %s61
    %p63 = scmp.eq.s32.totalorder %s14, 0
    %p64 = por %p62, %p63
    %s65 = ssub.s32 %s16, %s30
    %s66 = ssub.s32 %s17, %s26
    %s67 = sor.u32 %s65, %s66
    %p68 = scmp.eq.s32.totalorder %s67, 0
    %s70 = sadd.s32 %s69, 1
    %s71 = scalar_select %p68, %s69, %s70
    %p74 = pneg %p68
    %p75 = scmp.eq.s32.totalorder %s8, 2
    %p76 = por %p74, %p75
    %p77 = scmp.ne.s32.totalorder %s69, %s72
    %p78 = scmp.eq.s32.totalorder %s8, 0
    %p79 = por %p77, %p78
    %p80 = scmp.ne.s32.totalorder %s69, %s72
    %p81 = scmp.eq.s32.totalorder %s13, 2
    %p82 = por %p80, %p81
    %p83 = scmp.ne.s32.totalorder %s72, %s73
    %p84 = scmp.eq.s32.totalorder %s13, 0
    %p85 = por %p83, %p84
    %p86 = scmp.ne.s32.totalorder %s72, %s73
    %p87 = scmp.eq.s32.totalorder %s14, 2
    %p88 = por %p86, %p87
    %p90 = scmp.ne.s32.totalorder %s73, %s89
    %p91 = scmp.eq.s32.totalorder %s14, 0
    %p92 = por %p90, %p91
    %s93 = ssub.s32 %s15, %s34
    %p94 = scmp.eq.s32.totalorder %s93, 0
    %s96 = sadd.s32 %s95, 1
    %s97 = scalar_select %p94, %s95, %s96
    %p100 = pneg %p94
    %p101 = scmp.eq.s32.totalorder %s8, 2
    %p102 = por %p100, %p101
    %p103 = scmp.ne.s32.totalorder %s95, %s98
    %p104 = scmp.eq.s32.totalorder %s8, 0
    %p105 = por %p103, %p104
    %p106 = scmp.ne.s32.totalorder %s95, %s98
    %p107 = scmp.eq.s32.totalorder %s13, 2
    %p108 = por %p106, %p107
    %p109 = scmp.ne.s32.totalorder %s98, %s99
    %p110 = scmp.eq.s32.totalorder %s13, 0
    %p111 = por %p109, %p110
    %p112 = scmp.ne.s32.totalorder %s98, %s99
    %p113 = scmp.eq.s32.totalorder %s14, 2
    %p114 = por %p112, %p113
    %p116 = scmp.ne.s32.totalorder %s99, %s115
    %p117 = scmp.eq.s32.totalorder %s14, 0
    %p118 = por %p116, %p117
    %p119 = scmp.le.s32.totalorder 1, %s8
    %p120 = scmp.lt.s32.totalorder %s8, 4
    %p121 = pnand %p119, %p120
    %p122 = pneg %p121
    // Predicated region
    $region9: #{rgcn_two_layer_forward.7} parent=5 // pred_check
      _
    $region10: #{rgcn_two_layer_forward.7} parent=5 // pred_check_branch
      %124 = sbr.rel (%p121) target = $region12
    $region11: #{rgcn_two_layer_forward.7} parent=5 // pred_region
      %s125 = ssub.s32 %s8, 1
    $region12: #{rgcn_two_layer_forward.7} parent=5 // pred_fallthru
      _
    %p126 = scmp.lt.s32.totalorder %s8, 3
    // Predicated region
    $region13: #{rgcn_two_layer_forward.7} parent=5 // pred_check
      %p127 = pneg %p126
    $region14: #{rgcn_two_layer_forward.7} parent=5 // pred_check_branch
      %129 = sbr.rel (%p127) target = $region16
    $region15: #{rgcn_two_layer_forward.7} parent=5 // pred_region
      // Predicated region
      $region17: #{rgcn_two_layer_forward.7} parent=15 // pred_check
        %p130 = pneg %p51
      $region18: #{rgcn_two_layer_forward.7} parent=15 // pred_check_branch
        %132 = sbr.rel (%p130) target = $region20
      $region19: #{rgcn_two_layer_forward.7} parent=15 // pred_region
        %s133 = smul.u32 16, %s15
        %p134 = scmp.lt.s32.totalorder %s16, 2
        %s135 = scalar_select %p134, %s16, 2
        %p136 = scmp.lt.s32.totalorder %s133, 15
        %s137 = scalar_select %p136, %s133, 15
        %p138 = scmp.lt.s32.totalorder %s17, 0
        %s139 = scalar_select %p138, %s17, 0
        %s140 = sadd.s32 %s139, %s137
        %s141 = smul.addr %s135, 16
        %s142 = sadd.s32 %s140, %s141
        %s143 = smul.addr %s142, 4
        %s144 = scalar_lea.vmem %s0, %s143
        %s145 = smul.u32 16, %s15
      $region20: #{rgcn_two_layer_forward.7} parent=15 // pred_fallthru
        _
      // Predicated region
      $region21: #{rgcn_two_layer_forward.7} parent=15 // pred_check
        %p146 = pneg %p79
      $region22: #{rgcn_two_layer_forward.7} parent=15 // pred_check_branch
        %148 = sbr.rel (%p146) target = $region24
      $region23: #{rgcn_two_layer_forward.7} parent=15 // pred_region
        %s149 = smul.u32 16, %s17
        %p150 = scmp.lt.s32.totalorder %s16, 2
        %s151 = scalar_select %p150, %s16, 2
        %p152 = scmp.lt.s32.totalorder %s149, 15
        %s153 = scalar_select %p152, %s149, 15
        %s154 = smul.addr %s151, 16
        %s155 = sadd.s32 %s153, %s154
        %s156 = smul.addr %s155, 4
        %s157 = scalar_lea.vmem %s1, %s156
        %s158 = smul.u32 16, %s17
      $region24: #{rgcn_two_layer_forward.7} parent=15 // pred_fallthru
        _
    $region16: #{rgcn_two_layer_forward.7} parent=5 // pred_fallthru
      _
    %p159 = scmp.le.s32.totalorder 1, %s8
    %p160 = scmp.lt.s32.totalorder %s8, 4
    %p161 = pnand %p159, %p160
    %p162 = pneg %p161
    // Predicated region
    $region25: #{rgcn_two_layer_forward.7} parent=5 // pred_check
      _
    $region26: #{rgcn_two_layer_forward.7} parent=5 // pred_check_branch
      %164 = sbr.rel (%p161) target = $region28
    $region27: #{rgcn_two_layer_forward.7} parent=5 // pred_region
      %s165 = ssub.s32 %s8, 1
      %s166 = smul.u32 16, %s18
      %p167 = scmp.lt.s32.totalorder %s19, 2
      %s168 = scalar_select %p167, %s19, 2
      %p169 = scmp.lt.s32.totalorder %s166, 15
      %s170 = scalar_select %p169, %s166, 15
      %p171 = scmp.lt.s32.totalorder %s20, 0
      %s172 = scalar_select %p171, %s20, 0
      %s173 = sadd.s32 %s172, %s170
      %s174 = smul.addr %s168, 16
      %s175 = sadd.s32 %s173, %s174
      %s176 = smul.addr %s175, 4
      %s177 = scalar_lea.vmem %s0, %s176
      %p178 = pneg %p57
      %p179 = pneg %p54
      %s180 = smul.u32 16, %s20
      %p181 = scmp.lt.s32.totalorder %s19, 2
      %s182 = scalar_select %p181, %s19, 2
      %p183 = scmp.lt.s32.totalorder %s180, 15
      %s184 = scalar_select %p183, %s180, 15
      %s185 = smul.addr %s182, 16
      %s186 = sadd.s32 %s184, %s185
      %s187 = smul.addr %s186, 4
      %s188 = scalar_lea.vmem %s1, %s187
      %p189 = pneg %p85
      %p190 = pneg %p82
      %p191 = pneg %p111
      %p192 = pneg %p108
      %s193 = smul.u32 16, %s18
      %p194 = scmp.lt.s32.totalorder %s193, 15
      %s195 = scalar_select %p194, %s193, 15
      %s196 = smul.addr %s195, 8
      %s197 = scalar_lea.vmem %s2, %s196
      %s198 = smul.u32 16, %s18
      %p199 = scmp.lt.s32.totalorder %s19, 2
      %s200 = scalar_select %p199, %s19, 2
      %p201 = scmp.lt.s32.totalorder %s198, 15
      %s202 = scalar_select %p201, %s198, 15
      %p203 = scmp.lt.s32.totalorder %s20, 0
      %s204 = scalar_select %p203, %s20, 0
      %s205 = sadd.s32 %s204, %s202
      %s206 = smul.addr %s200, 16
      %s207 = sadd.s32 %s205, %s206
      %s208 = smul.addr %s207, 4
      %s209 = scalar_lea.vmem %s0, %s208
      %s210 = smul.u32 16, %s18
      %s211 = smul.u32 16, %s20
      %p212 = scmp.lt.s32.totalorder %s19, 2
      %s213 = scalar_select %p212, %s19, 2
      %p214 = scmp.lt.s32.totalorder %s211, 15
      %s215 = scalar_select %p214, %s211, 15
      %s216 = smul.addr %s213, 16
      %s217 = sadd.s32 %s215, %s216
      %s218 = smul.addr %s217, 4
      %s219 = scalar_lea.vmem %s1, %s218
      %s220 = smul.u32 16, %s20
      %s221 = smul.u32 16, %s18
      %p222 = scmp.lt.s32.totalorder %s221, 15
      %s223 = scalar_select %p222, %s221, 15
      %s224 = smul.addr %s223, 8
      %s225 = scalar_lea.vmem %s2, %s224
      %s226 = smul.u32 16, %s18
      %p228 = scmp.eq.s32.totalorder %s19, 0
      %p229 = scmp.eq.s32.totalorder %s20, 0
      %p230 = pnand %p228, %p229
      %p231 = pneg %p230
      %p232 = scmp.eq.s32.totalorder %s19, 2
      %p233 = pnand %p232, %p229
      %p234 = pneg %p233
      %v235 = vld [vmem:[%s209] sm:$0xf]
      %v236 = vld [vmem:[%s209 + $0x4] sm:$0xf]
      %v237 = vld [vmem:[%s209 + $0x8] sm:$0xf]
      %v238 = vld [vmem:[%s209 + $0xc] sm:$0xf]
      %v239 = vld [vmem:[%s209 + $0x10] sm:$0xf]
      %v240 = vld [vmem:[%s209 + $0x14] sm:$0xf]
      %v241 = vld [vmem:[%s209 + $0x18] sm:$0xf]
      %v242 = vld [vmem:[%s209 + $0x1c] sm:$0xf]
      %v243 = vld [vmem:[%s209 + $0x20] sm:$0xf]
      %v244 = vld [vmem:[%s209 + $0x24] sm:$0xf]
      %v245 = vld [vmem:[%s209 + $0x28] sm:$0xf]
      %v246 = vld [vmem:[%s209 + $0x2c] sm:$0xf]
      %v247 = vld [vmem:[%s209 + $0x30] sm:$0xf]
      %v248 = vld [vmem:[%s209 + $0x34] sm:$0xf]
      %v249 = vld [vmem:[%s209 + $0x38] sm:$0xf]
      %v250 = vld [vmem:[%s209 + $0x3c] sm:$0xf]
      %v251 = vld [vmem:[%s219] sm:$0xf]
      %v252 = vld [vmem:[%s219 + $0x4] sm:$0xf]
      %v253 = vld [vmem:[%s219 + $0x8] sm:$0xf]
      %v254 = vld [vmem:[%s219 + $0xc] sm:$0xf]
      %v255 = vld [vmem:[%s219 + $0x10] sm:$0xf]
      %v256 = vld [vmem:[%s219 + $0x14] sm:$0xf]
      %v257 = vld [vmem:[%s219 + $0x18] sm:$0xf]
      %v258 = vld [vmem:[%s219 + $0x1c] sm:$0xf]
      %v259 = vld [vmem:[%s219 + $0x20] sm:$0xf]
      %v260 = vld [vmem:[%s219 + $0x24] sm:$0xf]
      %v261 = vld [vmem:[%s219 + $0x28] sm:$0xf]
      %v262 = vld [vmem:[%s219 + $0x2c] sm:$0xf]
      %v263 = vld [vmem:[%s219 + $0x30] sm:$0xf]
      %v264 = vld [vmem:[%s219 + $0x34] sm:$0xf]
      %v265 = vld [vmem:[%s219 + $0x38] sm:$0xf]
      %v266 = vld [vmem:[%s219 + $0x3c] sm:$0xf]
      %v283 = vunpack.c.l.b16 %v235
      %v284 = vunpack.c.l.b16 %v236
      %v285 = vunpack.c.l.b16 %v237
      %v286 = vunpack.c.l.b16 %v238
      %v287 = vunpack.c.l.b16 %v239
      %v288 = vunpack.c.l.b16 %v240
      %v289 = vunpack.c.l.b16 %v241
      %v290 = vunpack.c.l.b16 %v242
      %v291 = vunpack.c.l.b16 %v243
      %v292 = vunpack.c.l.b16 %v244
      %v293 = vunpack.c.l.b16 %v245
      %v294 = vunpack.c.l.b16 %v246
      %v295 = vunpack.c.l.b16 %v247
      %v296 = vunpack.c.l.b16 %v248
      %v297 = vunpack.c.l.b16 %v249
      %v298 = vunpack.c.l.b16 %v250
      %v299 = vpack.c.b16 %v284, %v283
      %v300 = vpack.c.b16 %v286, %v285
      %v301 = vpack.c.b16 %v288, %v287
      %v302 = vpack.c.b16 %v290, %v289
      %v303 = vpack.c.b16 %v292, %v291
      %v304 = vpack.c.b16 %v294, %v293
      %v305 = vpack.c.b16 %v296, %v295
      %v306 = vpack.c.b16 %v298, %v297
      %v331 = vunpack.c.l.b16 %v251
      %v332 = vunpack.c.l.b16 %v252
      %v333 = vunpack.c.l.b16 %v253
      %v334 = vunpack.c.l.b16 %v254
      %v335 = vunpack.c.l.b16 %v255
      %v336 = vunpack.c.l.b16 %v256
      %v337 = vunpack.c.l.b16 %v257
      %v338 = vunpack.c.l.b16 %v258
      %v339 = vunpack.c.l.b16 %v259
      %v340 = vunpack.c.l.b16 %v260
      %v341 = vunpack.c.l.b16 %v261
      %v342 = vunpack.c.l.b16 %v262
      %v343 = vunpack.c.l.b16 %v263
      %v344 = vunpack.c.l.b16 %v264
      %v345 = vunpack.c.l.b16 %v265
      %v346 = vunpack.c.l.b16 %v266
      %v347 = vpack.c.b16 %v332, %v331
      %v348 = vpack.c.b16 %v334, %v333
      %v349 = vpack.c.b16 %v336, %v335
      %v350 = vpack.c.b16 %v338, %v337
      %v351 = vpack.c.b16 %v340, %v339
      %v352 = vpack.c.b16 %v342, %v341
      %v353 = vpack.c.b16 %v344, %v343
      %v354 = vpack.c.b16 %v346, %v345
      %363 = vmatprep.subr.bf16.mxu0 0
      %364 = vmatpush1.bf16.msra.mxu0 %v347
      %365 = vmatprep.subr.bf16.mxu0 0
      %366 = vmatpush1.bf16.msra.mxu0 %v348
      %367 = vmatprep.subr.bf16.mxu0 0
      %368 = vmatpush1.bf16.msra.mxu0 %v349
      %369 = vmatprep.subr.bf16.mxu0 0
      %370 = vmatpush1.bf16.msra.mxu0 %v350
      %371 = vmatprep.subr.bf16.mxu0 0
      %372 = vmatpush1.bf16.msra.mxu0 %v351
      %373 = vmatprep.subr.bf16.mxu0 0
      %374 = vmatpush1.bf16.msra.mxu0 %v352
      %375 = vmatprep.subr.bf16.mxu0 0
      %376 = vmatpush1.bf16.msra.mxu0 %v353
      %377 = vmatprep.subr.bf16.mxu0 0
      %378 = vmatpush1.bf16.msra.mxu0 %v354
      %379 = vmatprep.subr.bf16.mxu0 0
      %380 = vmatpush1.bf16.msra.mxu0 0
      %381 = vmatprep.subr.bf16.mxu0 0
      %382 = vmatpush1.bf16.msra.mxu0 0
      %383 = vmatprep.subr.bf16.mxu0 0
      %384 = vmatpush1.bf16.msra.mxu0 0
      %385 = vmatprep.subr.bf16.mxu0 0
      %386 = vmatpush1.bf16.msra.mxu0 0
      %387 = vmatprep.subr.bf16.mxu0 0
      %388 = vmatpush1.bf16.msra.mxu0 0
      %389 = vmatprep.subr.bf16.mxu0 0
      %390 = vmatpush1.bf16.msra.mxu0 0
      %391 = vmatprep.subr.bf16.mxu0 0
      %392 = vmatpush1.bf16.msra.mxu0 0
      %393 = vmatprep.subr.bf16.mxu0 0
      %394 = vmatpush1.bf16.msra.mxu0 0
      %395 = vmatprep.mubr.bf16.mxu0 0
      %396 = vmatmul.mubr.bf16.gmra.mrb[0].mxu0 %v299
      %v397 = vpop.f32.mrb[0].mxu0
      %v398 = vadd.f32 0.0, %v397
      %v399 = vpop.f32.mrb[0].mxu0
      %v400 = vpop.f32.mrb[0].mxu0
      %v401 = vadd.f32 0.0, %v400
      %v402 = vpop.f32.mrb[0].mxu0
      %403 = vmatprep.mubr.bf16.mxu0 0
      %404 = vmatmul.mubr.bf16.gmra.mrb[0].mxu0 %v300
      %v405 = vpop.f32.mrb[0].mxu0
      %v406 = vadd.f32 0.0, %v405
      %v407 = vpop.f32.mrb[0].mxu0
      %v408 = vpop.f32.mrb[0].mxu0
      %v409 = vadd.f32 0.0, %v408
      %v410 = vpop.f32.mrb[0].mxu0
      %411 = vmatprep.mubr.bf16.mxu0 0
      %412 = vmatmul.mubr.bf16.gmra.mrb[0].mxu0 %v301
      %v413 = vpop.f32.mrb[0].mxu0
      %v414 = vadd.f32 0.0, %v413
      %v415 = vpop.f32.mrb[0].mxu0
      %v416 = vpop.f32.mrb[0].mxu0
      %v417 = vadd.f32 0.0, %v416
      %v418 = vpop.f32.mrb[0].mxu0
      %419 = vmatprep.mubr.bf16.mxu0 0
      %420 = vmatmul.mubr.bf16.gmra.mrb[0].mxu0 %v302
      %v421 = vpop.f32.mrb[0].mxu0
      %v422 = vadd.f32 0.0, %v421
      %v423 = vpop.f32.mrb[0].mxu0
      %v424 = vpop.f32.mrb[0].mxu0
      %v425 = vadd.f32 0.0, %v424
      %v426 = vpop.f32.mrb[0].mxu0
      %427 = vmatprep.mubr.bf16.mxu0 0
      %428 = vmatmul.mubr.bf16.gmra.mrb[0].mxu0 %v303
      %v429 = vpop.f32.mrb[0].mxu0
      %v430 = vadd.f32 0.0, %v429
      %v431 = vpop.f32.mrb[0].mxu0
      %v432 = vpop.f32.mrb[0].mxu0
      %v433 = vadd.f32 0.0, %v432
      %v434 = vpop.f32.mrb[0].mxu0
      %435 = vmatprep.mubr.bf16.mxu0 0
      %436 = vmatmul.mubr.bf16.gmra.mrb[0].mxu0 %v304
      %v437 = vpop.f32.mrb[0].mxu0
      %v438 = vadd.f32 0.0, %v437
      %v439 = vpop.f32.mrb[0].mxu0
      %v440 = vpop.f32.mrb[0].mxu0
      %v441 = vadd.f32 0.0, %v440
      %v442 = vpop.f32.mrb[0].mxu0
      %443 = vmatprep.mubr.bf16.mxu0 0
      %444 = vmatmul.mubr.bf16.gmra.mrb[0].mxu0 %v305
      %v445 = vpop.f32.mrb[0].mxu0
      %v446 = vadd.f32 0.0, %v445
      %v447 = vpop.f32.mrb[0].mxu0
      %v448 = vpop.f32.mrb[0].mxu0
      %v449 = vadd.f32 0.0, %v448
      %v450 = vpop.f32.mrb[0].mxu0
      %451 = vmatprep.mubr.bf16.mxu0 0
      %452 = vmatmul.mubr.bf16.gmra.mrb[0].mxu0 %v306
      %v453 = vpop.f32.mrb[0].mxu0
      %v454 = vadd.f32 0.0, %v453
      %v455 = vpop.f32.mrb[0].mxu0
      %v456 = vpop.f32.mrb[0].mxu0
      %v457 = vadd.f32 0.0, %v456
      %v458 = vpop.f32.mrb[0].mxu0
      %459 = vdwg.mxu0
      // Predicated region
      $region29: #{rgcn_two_layer_forward.7} parent=27 // pred_check
        _
      $region30: #{rgcn_two_layer_forward.7} parent=27 // pred_check_branch
        %461 = sbr.rel (%p230) target = $region32
      $region31: #{rgcn_two_layer_forward.7} parent=27 // pred_region
        %462 = vst [vmem:[#allocation2] sm:$0xff] %v398
        %463 = vst [vmem:[#allocation2 + $0x8] sm:$0xff] %v401
        %464 = vst [vmem:[#allocation2 + $0x10] sm:$0xff] %v406
        %465 = vst [vmem:[#allocation2 + $0x18] sm:$0xff] %v409
        %466 = vst [vmem:[#allocation2 + $0x20] sm:$0xff] %v414
        %467 = vst [vmem:[#allocation2 + $0x28] sm:$0xff] %v417
        %468 = vst [vmem:[#allocation2 + $0x30] sm:$0xff] %v422
        %469 = vst [vmem:[#allocation2 + $0x38] sm:$0xff] %v425
        %470 = vst [vmem:[#allocation2 + $0x40] sm:$0xff] %v430
        %471 = vst [vmem:[#allocation2 + $0x48] sm:$0xff] %v433
        %472 = vst [vmem:[#allocation2 + $0x50] sm:$0xff] %v438
        %473 = vst [vmem:[#allocation2 + $0x58] sm:$0xff] %v441
        %474 = vst [vmem:[#allocation2 + $0x60] sm:$0xff] %v446
        %475 = vst [vmem:[#allocation2 + $0x68] sm:$0xff] %v449
        %476 = vst [vmem:[#allocation2 + $0x70] sm:$0xff] %v454
        %477 = vst [vmem:[#allocation2 + $0x78] sm:$0xff] %v457
      $region32: #{rgcn_two_layer_forward.7} parent=27 // pred_fallthru
        _
      %p478 = pneg %p231
      // Predicated region
      $region33: #{rgcn_two_layer_forward.7} parent=27 // pred_check
        _
      $region34: #{rgcn_two_layer_forward.7} parent=27 // pred_check_branch
        %480 = sbr.rel (%p231) target = $region36
      $region35: #{rgcn_two_layer_forward.7} parent=27 // pred_region
        %v481 = vld [vmem:[#allocation2] sm:$0xff]
        %v482 = vld [vmem:[#allocation2 + $0x8] sm:$0xff]
        %v483 = vld [vmem:[#allocation2 + $0x10] sm:$0xff]
        %v484 = vld [vmem:[#allocation2 + $0x18] sm:$0xff]
        %v485 = vld [vmem:[#allocation2 + $0x20] sm:$0xff]
        %v486 = vld [vmem:[#allocation2 + $0x28] sm:$0xff]
        %v487 = vld [vmem:[#allocation2 + $0x30] sm:$0xff]
        %v488 = vld [vmem:[#allocation2 + $0x38] sm:$0xff]
        %v489 = vld [vmem:[#allocation2 + $0x40] sm:$0xff]
        %v490 = vld [vmem:[#allocation2 + $0x48] sm:$0xff]
        %v491 = vld [vmem:[#allocation2 + $0x50] sm:$0xff]
        %v492 = vld [vmem:[#allocation2 + $0x58] sm:$0xff]
        %v493 = vld [vmem:[#allocation2 + $0x60] sm:$0xff]
        %v494 = vld [vmem:[#allocation2 + $0x68] sm:$0xff]
        %v495 = vld [vmem:[#allocation2 + $0x70] sm:$0xff]
        %v496 = vld [vmem:[#allocation2 + $0x78] sm:$0xff]
        %v497 = vadd.f32 %v481, %v398
        %v498 = vadd.f32 %v482, %v401
        %v499 = vadd.f32 %v483, %v406
        %v500 = vadd.f32 %v484, %v409
        %v501 = vadd.f32 %v485, %v414
        %v502 = vadd.f32 %v486, %v417
        %v503 = vadd.f32 %v487, %v422
        %v504 = vadd.f32 %v488, %v425
        %v505 = vadd.f32 %v489, %v430
        %v506 = vadd.f32 %v490, %v433
        %v507 = vadd.f32 %v491, %v438
        %v508 = vadd.f32 %v492, %v441
        %v509 = vadd.f32 %v493, %v446
        %v510 = vadd.f32 %v494, %v449
        %v511 = vadd.f32 %v495, %v454
        %v512 = vadd.f32 %v496, %v457
        %513 = vst [vmem:[#allocation2] sm:$0xff] %v497
        %514 = vst [vmem:[#allocation2 + $0x8] sm:$0xff] %v498
        %515 = vst [vmem:[#allocation2 + $0x10] sm:$0xff] %v499
        %516 = vst [vmem:[#allocation2 + $0x18] sm:$0xff] %v500
        %517 = vst [vmem:[#allocation2 + $0x20] sm:$0xff] %v501
        %518 = vst [vmem:[#allocation2 + $0x28] sm:$0xff] %v502
        %519 = vst [vmem:[#allocation2 + $0x30] sm:$0xff] %v503
        %520 = vst [vmem:[#allocation2 + $0x38] sm:$0xff] %v504
        %521 = vst [vmem:[#allocation2 + $0x40] sm:$0xff] %v505
        %522 = vst [vmem:[#allocation2 + $0x48] sm:$0xff] %v506
        %523 = vst [vmem:[#allocation2 + $0x50] sm:$0xff] %v507
        %524 = vst [vmem:[#allocation2 + $0x58] sm:$0xff] %v508
        %525 = vst [vmem:[#allocation2 + $0x60] sm:$0xff] %v509
        %526 = vst [vmem:[#allocation2 + $0x68] sm:$0xff] %v510
        %527 = vst [vmem:[#allocation2 + $0x70] sm:$0xff] %v511
        %528 = vst [vmem:[#allocation2 + $0x78] sm:$0xff] %v512
      $region36: #{rgcn_two_layer_forward.7} parent=27 // pred_fallthru
        _
      // Predicated region
      $region37: #{rgcn_two_layer_forward.7} parent=27 // pred_check
        _
      $region38: #{rgcn_two_layer_forward.7} parent=27 // pred_check_branch
        %530 = sbr.rel (%p233) target = $region40
      $region39: #{rgcn_two_layer_forward.7} parent=27 // pred_region
        %v531 = vld [vmem:[#allocation2] sm:$0xff]
        %v532 = vld [vmem:[#allocation2 + $0x8] sm:$0xff]
        %v533 = vld [vmem:[#allocation2 + $0x10] sm:$0xff]
        %v534 = vld [vmem:[#allocation2 + $0x18] sm:$0xff]
        %v535 = vld [vmem:[#allocation2 + $0x20] sm:$0xff]
        %v536 = vld [vmem:[#allocation2 + $0x28] sm:$0xff]
        %v537 = vld [vmem:[#allocation2 + $0x30] sm:$0xff]
        %v538 = vld [vmem:[#allocation2 + $0x38] sm:$0xff]
        %v539 = vld [vmem:[#allocation2 + $0x40] sm:$0xff]
        %v540 = vld [vmem:[#allocation2 + $0x48] sm:$0xff]
        %v541 = vld [vmem:[#allocation2 + $0x50] sm:$0xff]
        %v542 = vld [vmem:[#allocation2 + $0x58] sm:$0xff]
        %v543 = vld [vmem:[#allocation2 + $0x60] sm:$0xff]
        %v544 = vld [vmem:[#allocation2 + $0x68] sm:$0xff]
        %v545 = vld [vmem:[#allocation2 + $0x70] sm:$0xff]
        %v546 = vld [vmem:[#allocation2 + $0x78] sm:$0xff]
        %547 = vst [vmem:[%s225] sm:$0xff] %v531
        %548 = vst [vmem:[%s225 + $0x8] sm:$0xff] %v532
        %549 = vst [vmem:[%s225 + $0x10] sm:$0xff] %v533
        %550 = vst [vmem:[%s225 + $0x18] sm:$0xff] %v534
        %551 = vst [vmem:[%s225 + $0x20] sm:$0xff] %v535
        %552 = vst [vmem:[%s225 + $0x28] sm:$0xff] %v536
        %553 = vst [vmem:[%s225 + $0x30] sm:$0xff] %v537
        %554 = vst [vmem:[%s225 + $0x38] sm:$0xff] %v538
        %555 = vst [vmem:[%s225 + $0x40] sm:$0xff] %v539
        %556 = vst [vmem:[%s225 + $0x48] sm:$0xff] %v540
        %557 = vst [vmem:[%s225 + $0x50] sm:$0xff] %v541
        %558 = vst [vmem:[%s225 + $0x58] sm:$0xff] %v542
        %559 = vst [vmem:[%s225 + $0x60] sm:$0xff] %v543
        %560 = vst [vmem:[%s225 + $0x68] sm:$0xff] %v544
        %561 = vst [vmem:[%s225 + $0x70] sm:$0xff] %v545
        %562 = vst [vmem:[%s225 + $0x78] sm:$0xff] %v546
      $region40: #{rgcn_two_layer_forward.7} parent=27 // pred_fallthru
        _
      %s563 = smul.u32 16, %s18
      %p564 = scmp.lt.s32.totalorder %s563, 15
      %s565 = scalar_select %p564, %s563, 15
      %s566 = smul.addr %s565, 8
      %s567 = scalar_lea.vmem %s2, %s566
      // Predicated region
      $region41: #{rgcn_two_layer_forward.7} parent=27 // pred_check
        %p568 = pneg %p108
      $region42: #{rgcn_two_layer_forward.7} parent=27 // pred_check_branch
        %570 = sbr.rel (%p568) target = $region44
      $region43: #{rgcn_two_layer_forward.7} parent=27 // pred_region
        %s571 = smul.u32 16, %s18
      $region44: #{rgcn_two_layer_forward.7} parent=27 // pred_fallthru
        _
      // Predicated region
      $region45: #{rgcn_two_layer_forward.7} parent=27 // pred_check
        %p572 = pneg %p108
      $region46: #{rgcn_two_layer_forward.7} parent=27 // pred_check_branch
        %574 = sbr.rel (%p572) target = $region48
      $region47: #{rgcn_two_layer_forward.7} parent=27 // pred_region
        %s575 = smul.u32 16, %s18
        %p576 = scmp.lt.s32.totalorder %s575, 15
        %s577 = scalar_select %p576, %s575, 15
        %s578 = smul.addr %s577, 8
        %s579 = scalar_lea.vmem %s2, %s578
      $region48: #{rgcn_two_layer_forward.7} parent=27 // pred_fallthru
        _
    $region28: #{rgcn_two_layer_forward.7} parent=5 // pred_fallthru
      _
    %p580 = scmp.le.s32.totalorder 2, %s8
    // Predicated region
    $region49: #{rgcn_two_layer_forward.7} parent=5 // pred_check
      %p581 = pneg %p580
    $region50: #{rgcn_two_layer_forward.7} parent=5 // pred_check_branch
      %583 = sbr.rel (%p581) target = $region52
    $region51: #{rgcn_two_layer_forward.7} parent=5 // pred_region
      %s584 = ssub.s32 %s8, 2
    $region52: #{rgcn_two_layer_forward.7} parent=5 // pred_fallthru
      _
  $region6: #{rgcn_two_layer_forward.7} parent=0 // loop_footer
    %s12 = sadd.s32 1, %s8
  $region7: #{rgcn_two_layer_forward.7} parent=0 // loop_footer_branch
    %7 = sbr.rel target = $region3
  $region8: #{rgcn_two_layer_forward.7} parent=0 // loop_exit
    _

// kernel: rgcn_two_layer_forward.4
$region0: #{rgcn_two_layer_forward.4}
  #allocation0 [shape = 'u32[]', space=smem, size = 0x4, offset = 0x4, fixed_abs, tag = 'smem constant byte address 0x4 - core index']
  #allocation1 [shape = 'u32[144,128]{1,0:T(1,128)}', space=vmem, size = 0x12000, scoped, tag = 'internal scratch']
  #allocation2 [shape = 'f32[128,128]{1,0:T(8,128)}', space=vmem, size = 0x10000, scoped, tag = 'scratch operand']
  %s0 = inlined_call_operand.vmem [shape: bf16[128,128], index: 0, kind: input, shape index: {}]
  %s1 = inlined_call_operand.vmem [shape: bf16[3,128,128], index: 1, kind: input, shape index: {}]
  %s2 = inlined_call_operand.vmem [shape: bf16[3,128,128], index: 2, kind: output, shape index: {}]
  %s3 = sld [smem:[#allocation0]]
  $region53: #{rgcn_two_layer_forward.4} parent=0
    _
  %s5 = ssub.s32 1, %s3
  %s6 = scalar_select 0, %s5, %s3
  loop: start=0, step=1, limit=5
  $region2: #{rgcn_two_layer_forward.4} parent=0 // loop_pre_header
    _
  $region3: #{rgcn_two_layer_forward.4} parent=0 // loop_header
    %s8 = sphi 0, %s12
    %p9 = scmp.ge.s32.totalorder %s8, 5
    %s15 = sphi 0, %s34
    %s16 = sphi 0, %s30
    %s17 = sphi 0, %s26
    %s18 = sphi 0, %s15
    %s19 = sphi 0, %s16
    %s20 = sphi 0, %s17
    %s21 = sphi 0, %s18
    %s22 = sphi 0, %s19
    %s23 = sphi 0, %s20
    %s39 = sphi 0, %s41
    %s42 = sphi 0, %s39
    %s43 = sphi 0, %s42
    %s59 = sphi 0, %s43
    %s67 = sphi 0, %s69
    %s70 = sphi 0, %s67
    %s71 = sphi 0, %s70
    %s87 = sphi 0, %s71
    %s95 = sphi 0, %s97
    %s98 = sphi 0, %s95
    %s99 = sphi 0, %s98
    %s115 = sphi 0, %s99
  $region4: #{rgcn_two_layer_forward.4} parent=0 // loop_header_branch
    %11 = sbr.rel (%p9) target = $region8
  $region5: #{rgcn_two_layer_forward.4} parent=0 // loop_body
    %s13 = ssub.s32 %s8, 1
    %s14 = ssub.s32 %s8, 2
    %s24 = sadd.s32 1, %s17
    %p25 = scmp.ge.s32.totalorder %s24, 1
    %s26 = scalar_select %p25, 0, %s24
    %s27 = sadd.s32 1, %s16
    %s28 = scalar_select %p25, %s27, %s16
    %p29 = scmp.ge.s32.totalorder %s28, 1
    %s30 = scalar_select %p29, 0, %s28
    %s31 = sadd.s32 1, %s15
    %s32 = scalar_select %p29, %s31, %s15
    %p33 = scmp.ge.s32.totalorder %s32, 3
    %s34 = scalar_select %p33, 0, %s32
    %s35 = ssub.s32 %s16, %s30
    %s36 = ssub.s32 %s17, %s26
    %s37 = sor.u32 %s35, %s36
    %p38 = scmp.eq.s32.totalorder %s37, 0
    %s40 = sadd.s32 %s39, 1
    %s41 = scalar_select %p38, %s39, %s40
    %p44 = pneg %p38
    %p45 = scmp.eq.s32.totalorder %s8, 2
    %p46 = por %p44, %p45
    %p47 = scmp.ne.s32.totalorder %s39, %s42
    %p48 = scmp.eq.s32.totalorder %s8, 0
    %p49 = por %p47, %p48
    %p50 = scmp.ne.s32.totalorder %s39, %s42
    %p51 = scmp.eq.s32.totalorder %s13, 2
    %p52 = por %p50, %p51
    %p53 = scmp.ne.s32.totalorder %s42, %s43
    %p54 = scmp.eq.s32.totalorder %s13, 0
    %p55 = por %p53, %p54
    %p56 = scmp.ne.s32.totalorder %s42, %s43
    %p57 = scmp.eq.s32.totalorder %s14, 2
    %p58 = por %p56, %p57
    %p60 = scmp.ne.s32.totalorder %s43, %s59
    %p61 = scmp.eq.s32.totalorder %s14, 0
    %p62 = por %p60, %p61
    %s63 = ssub.s32 %s15, %s34
    %s64 = ssub.s32 %s17, %s26
    %s65 = sor.u32 %s63, %s64
    %p66 = scmp.eq.s32.totalorder %s65, 0
    %s68 = sadd.s32 %s67, 1
    %s69 = scalar_select %p66, %s67, %s68
    %p72 = pneg %p66
    %p73 = scmp.eq.s32.totalorder %s8, 2
    %p74 = por %p72, %p73
    %p75 = scmp.ne.s32.totalorder %s67, %s70
    %p76 = scmp.eq.s32.totalorder %s8, 0
    %p77 = por %p75, %p76
    %p78 = scmp.ne.s32.totalorder %s67, %s70
    %p79 = scmp.eq.s32.totalorder %s13, 2
    %p80 = por %p78, %p79
    %p81 = scmp.ne.s32.totalorder %s70, %s71
    %p82 = scmp.eq.s32.totalorder %s13, 0
    %p83 = por %p81, %p82
    %p84 = scmp.ne.s32.totalorder %s70, %s71
    %p85 = scmp.eq.s32.totalorder %s14, 2
    %p86 = por %p84, %p85
    %p88 = scmp.ne.s32.totalorder %s71, %s87
    %p89 = scmp.eq.s32.totalorder %s14, 0
    %p90 = por %p88, %p89
    %s91 = ssub.s32 %s15, %s34
    %s92 = ssub.s32 %s16, %s30
    %s93 = sor.u32 %s91, %s92
    %p94 = scmp.eq.s32.totalorder %s93, 0
    %s96 = sadd.s32 %s95, 1
    %s97 = scalar_select %p94, %s95, %s96
    %p100 = pneg %p94
    %p101 = scmp.eq.s32.totalorder %s8, 2
    %p102 = por %p100, %p101
    %p103 = scmp.ne.s32.totalorder %s95, %s98
    %p104 = scmp.eq.s32.totalorder %s8, 0
    %p105 = por %p103, %p104
    %p106 = scmp.ne.s32.totalorder %s95, %s98
    %p107 = scmp.eq.s32.totalorder %s13, 2
    %p108 = por %p106, %p107
    %p109 = scmp.ne.s32.totalorder %s98, %s99
    %p110 = scmp.eq.s32.totalorder %s13, 0
    %p111 = por %p109, %p110
    %p112 = scmp.ne.s32.totalorder %s98, %s99
    %p113 = scmp.eq.s32.totalorder %s14, 2
    %p114 = por %p112, %p113
    %p116 = scmp.ne.s32.totalorder %s99, %s115
    %p117 = scmp.eq.s32.totalorder %s14, 0
    %p118 = por %p116, %p117
    %p119 = scmp.le.s32.totalorder 1, %s8
    %p120 = scmp.lt.s32.totalorder %s8, 4
    %p121 = pnand %p119, %p120
    %p122 = pneg %p121
    // Predicated region
    $region9: #{rgcn_two_layer_forward.4} parent=5 // pred_check
      _
    $region10: #{rgcn_two_layer_forward.4} parent=5 // pred_check_branch
      %124 = sbr.rel (%p121) target = $region12
    $region11: #{rgcn_two_layer_forward.4} parent=5 // pred_region
      %s125 = ssub.s32 %s8, 1
      // Predicated region
      $region13: #{rgcn_two_layer_forward.4} parent=11 // pred_check
        %p126 = pneg %p55
      $region14: #{rgcn_two_layer_forward.4} parent=11 // pred_check_branch
        %128 = sbr.rel (%p126) target = $region16
      $region15: #{rgcn_two_layer_forward.4} parent=11 // pred_region
        %s129 = smul.u32 16, %s19
        %p130 = scmp.lt.s32.totalorder %s129, 15
        %s131 = scalar_select %p130, %s129, 15
        %p132 = scmp.lt.s32.totalorder %s20, 0
        %s133 = scalar_select %p132, %s20, 0
        %s134 = sadd.s32 %s133, %s131
        %s135 = smul.addr %s134, 4
        %s136 = scalar_lea.vmem %s0, %s135
        %s137 = smul.u32 16, %s19
      $region16: #{rgcn_two_layer_forward.4} parent=11 // pred_fallthru
        _
    $region12: #{rgcn_two_layer_forward.4} parent=5 // pred_fallthru
      _
    %p138 = scmp.lt.s32.totalorder %s8, 3
    // Predicated region
    $region17: #{rgcn_two_layer_forward.4} parent=5 // pred_check
      %p139 = pneg %p138
    $region18: #{rgcn_two_layer_forward.4} parent=5 // pred_check_branch
      %141 = sbr.rel (%p139) target = $region20
    $region19: #{rgcn_two_layer_forward.4} parent=5 // pred_region
      // Predicated region
      $region21: #{rgcn_two_layer_forward.4} parent=19 // pred_check
        %p142 = pneg %p77
      $region22: #{rgcn_two_layer_forward.4} parent=19 // pred_check_branch
        %144 = sbr.rel (%p142) target = $region24
      $region23: #{rgcn_two_layer_forward.4} parent=19 // pred_region
        %s145 = smul.u32 16, %s17
        %p146 = scmp.lt.s32.totalorder %s15, 2
        %s147 = scalar_select %p146, %s15, 2
        %p148 = scmp.lt.s32.totalorder %s145, 15
        %s149 = scalar_select %p148, %s145, 15
        %s150 = smul.addr %s147, 16
        %s151 = sadd.s32 %s149, %s150
        %s152 = smul.addr %s151, 4
        %s153 = scalar_lea.vmem %s1, %s152
        %s154 = smul.u32 16, %s17
      $region24: #{rgcn_two_layer_forward.4} parent=19 // pred_fallthru
        _
    $region20: #{rgcn_two_layer_forward.4} parent=5 // pred_fallthru
      _
    %p155 = scmp.le.s32.totalorder 1, %s8
    %p156 = scmp.lt.s32.totalorder %s8, 4
    %p157 = pnand %p155, %p156
    %p158 = pneg %p157
    // Predicated region
    $region25: #{rgcn_two_layer_forward.4} parent=5 // pred_check
      _
    $region26: #{rgcn_two_layer_forward.4} parent=5 // pred_check_branch
      %160 = sbr.rel (%p157) target = $region28
    $region27: #{rgcn_two_layer_forward.4} parent=5 // pred_region
      %s161 = ssub.s32 %s8, 1
      %s162 = smul.u32 16, %s19
      %p163 = scmp.lt.s32.totalorder %s162, 15
      %s164 = scalar_select %p163, %s162, 15
      %p165 = scmp.lt.s32.totalorder %s20, 0
      %s166 = scalar_select %p165, %s20, 0
      %s167 = sadd.s32 %s166, %s164
      %s168 = smul.addr %s167, 4
      %s169 = scalar_lea.vmem %s0, %s168
      %p170 = pneg %p55
      %p171 = pneg %p52
      %s172 = smul.u32 16, %s20
      %p173 = scmp.lt.s32.totalorder %s18, 2
      %s174 = scalar_select %p173, %s18, 2
      %p175 = scmp.lt.s32.totalorder %s172, 15
      %s176 = scalar_select %p175, %s172, 15
      %s177 = smul.addr %s174, 16
      %s178 = sadd.s32 %s176, %s177
      %s179 = smul.addr %s178, 4
      %s180 = scalar_lea.vmem %s1, %s179
      %p181 = pneg %p83
      %p182 = pneg %p80
      %p183 = pneg %p111
      %p184 = pneg %p108
      %s185 = smul.u32 16, %s19
      %p186 = scmp.lt.s32.totalorder %s18, 2
      %s187 = scalar_select %p186, %s18, 2
      %p188 = scmp.lt.s32.totalorder %s185, 15
      %s189 = scalar_select %p188, %s185, 15
      %s190 = smul.addr %s187, 16
      %s191 = sadd.s32 %s189, %s190
      %s192 = smul.addr %s191, 4
      %s193 = scalar_lea.vmem %s2, %s192
      %s194 = smul.u32 16, %s19
      %p195 = scmp.lt.s32.totalorder %s194, 15
      %s196 = scalar_select %p195, %s194, 15
      %p197 = scmp.lt.s32.totalorder %s20, 0
      %s198 = scalar_select %p197, %s20, 0
      %s199 = sadd.s32 %s198, %s196
      %s200 = smul.addr %s199, 4
      %s201 = scalar_lea.vmem %s0, %s200
      %s202 = smul.u32 16, %s19
      %s203 = smul.u32 16, %s20
      %p204 = scmp.lt.s32.totalorder %s18, 2
      %s205 = scalar_select %p204, %s18, 2
      %p206 = scmp.lt.s32.totalorder %s203, 15
      %s207 = scalar_select %p206, %s203, 15
      %s208 = smul.addr %s205, 16
      %s209 = sadd.s32 %s207, %s208
      %s210 = smul.addr %s209, 4
      %s211 = scalar_lea.vmem %s1, %s210
      %s212 = smul.u32 16, %s20
      %s213 = smul.u32 16, %s19
      %p214 = scmp.lt.s32.totalorder %s18, 2
      %s215 = scalar_select %p214, %s18, 2
      %p216 = scmp.lt.s32.totalorder %s213, 15
      %s217 = scalar_select %p216, %s213, 15
      %s218 = smul.addr %s215, 16
      %s219 = sadd.s32 %s217, %s218
      %s220 = smul.addr %s219, 4
      %s221 = scalar_lea.vmem %s2, %s220
      %s222 = smul.u32 16, %s19
      %v224 = vld [vmem:[%s201] sm:$0xf]
      %v225 = vld [vmem:[%s201 + $0x4] sm:$0xf]
      %v226 = vld [vmem:[%s201 + $0x8] sm:$0xf]
      %v227 = vld [vmem:[%s201 + $0xc] sm:$0xf]
      %v228 = vld [vmem:[%s201 + $0x10] sm:$0xf]
      %v229 = vld [vmem:[%s201 + $0x14] sm:$0xf]
      %v230 = vld [vmem:[%s201 + $0x18] sm:$0xf]
      %v231 = vld [vmem:[%s201 + $0x1c] sm:$0xf]
      %v232 = vld [vmem:[%s201 + $0x20] sm:$0xf]
      %v233 = vld [vmem:[%s201 + $0x24] sm:$0xf]
      %v234 = vld [vmem:[%s201 + $0x28] sm:$0xf]
      %v235 = vld [vmem:[%s201 + $0x2c] sm:$0xf]
      %v236 = vld [vmem:[%s201 + $0x30] sm:$0xf]
      %v237 = vld [vmem:[%s201 + $0x34] sm:$0xf]
      %v238 = vld [vmem:[%s201 + $0x38] sm:$0xf]
      %v239 = vld [vmem:[%s201 + $0x3c] sm:$0xf]
      %v240 = vld [vmem:[%s211] sm:$0xf]
      %v241 = vld [vmem:[%s211 + $0x4] sm:$0xf]
      %v242 = vld [vmem:[%s211 + $0x8] sm:$0xf]
      %v243 = vld [vmem:[%s211 + $0xc] sm:$0xf]
      %v244 = vld [vmem:[%s211 + $0x10] sm:$0xf]
      %v245 = vld [vmem:[%s211 + $0x14] sm:$0xf]
      %v246 = vld [vmem:[%s211 + $0x18] sm:$0xf]
      %v247 = vld [vmem:[%s211 + $0x1c] sm:$0xf]
      %v248 = vld [vmem:[%s211 + $0x20] sm:$0xf]
      %v249 = vld [vmem:[%s211 + $0x24] sm:$0xf]
      %v250 = vld [vmem:[%s211 + $0x28] sm:$0xf]
      %v251 = vld [vmem:[%s211 + $0x2c] sm:$0xf]
      %v252 = vld [vmem:[%s211 + $0x30] sm:$0xf]
      %v253 = vld [vmem:[%s211 + $0x34] sm:$0xf]
      %v254 = vld [vmem:[%s211 + $0x38] sm:$0xf]
      %v255 = vld [vmem:[%s211 + $0x3c] sm:$0xf]
      %v272 = vunpack.c.l.b16 %v224
      %v273 = vunpack.c.l.b16 %v225
      %v274 = vunpack.c.l.b16 %v226
      %v275 = vunpack.c.l.b16 %v227
      %v276 = vunpack.c.l.b16 %v228
      %v277 = vunpack.c.l.b16 %v229
      %v278 = vunpack.c.l.b16 %v230
      %v279 = vunpack.c.l.b16 %v231
      %v280 = vunpack.c.l.b16 %v232
      %v281 = vunpack.c.l.b16 %v233
      %v282 = vunpack.c.l.b16 %v234
      %v283 = vunpack.c.l.b16 %v235
      %v284 = vunpack.c.l.b16 %v236
      %v285 = vunpack.c.l.b16 %v237
      %v286 = vunpack.c.l.b16 %v238
      %v287 = vunpack.c.l.b16 %v239
      %v288 = vpack.c.b16 %v273, %v272
      %v289 = vpack.c.b16 %v275, %v274
      %v290 = vpack.c.b16 %v277, %v276
      %v291 = vpack.c.b16 %v279, %v278
      %v292 = vpack.c.b16 %v281, %v280
      %v293 = vpack.c.b16 %v283, %v282
      %v294 = vpack.c.b16 %v285, %v284
      %v295 = vpack.c.b16 %v287, %v286
      %v320 = vunpack.c.l.b16 %v240
      %v321 = vunpack.c.l.b16 %v241
      %v322 = vunpack.c.l.b16 %v242
      %v323 = vunpack.c.l.b16 %v243
      %v324 = vunpack.c.l.b16 %v244
      %v325 = vunpack.c.l.b16 %v245
      %v326 = vunpack.c.l.b16 %v246
      %v327 = vunpack.c.l.b16 %v247
      %v328 = vunpack.c.l.b16 %v248
      %v329 = vunpack.c.l.b16 %v249
      %v330 = vunpack.c.l.b16 %v250
      %v331 = vunpack.c.l.b16 %v251
      %v332 = vunpack.c.l.b16 %v252
      %v333 = vunpack.c.l.b16 %v253
      %v334 = vunpack.c.l.b16 %v254
      %v335 = vunpack.c.l.b16 %v255
      %v336 = vpack.c.b16 %v321, %v320
      %v337 = vpack.c.b16 %v323, %v322
      %v338 = vpack.c.b16 %v325, %v324
      %v339 = vpack.c.b16 %v327, %v326
      %v340 = vpack.c.b16 %v329, %v328
      %v341 = vpack.c.b16 %v331, %v330
      %v342 = vpack.c.b16 %v333, %v332
      %v343 = vpack.c.b16 %v335, %v334
      %352 = vmatprep.subr.bf16.mxu0 0
      %353 = vmatpush1.bf16.msra.mxu0 %v336
      %354 = vmatprep.subr.bf16.mxu0 0
      %355 = vmatpush1.bf16.msra.mxu0 %v337
      %356 = vmatprep.subr.bf16.mxu0 0
      %357 = vmatpush1.bf16.msra.mxu0 %v338
      %358 = vmatprep.subr.bf16.mxu0 0
      %359 = vmatpush1.bf16.msra.mxu0 %v339
      %360 = vmatprep.subr.bf16.mxu0 0
      %361 = vmatpush1.bf16.msra.mxu0 %v340
      %362 = vmatprep.subr.bf16.mxu0 0
      %363 = vmatpush1.bf16.msra.mxu0 %v341
      %364 = vmatprep.subr.bf16.mxu0 0
      %365 = vmatpush1.bf16.msra.mxu0 %v342
      %366 = vmatprep.subr.bf16.mxu0 0
      %367 = vmatpush1.bf16.msra.mxu0 %v343
      %368 = vmatprep.subr.bf16.mxu0 0
      %369 = vmatpush1.bf16.msra.mxu0 0
      %370 = vmatprep.subr.bf16.mxu0 0
      %371 = vmatpush1.bf16.msra.mxu0 0
      %372 = vmatprep.subr.bf16.mxu0 0
      %373 = vmatpush1.bf16.msra.mxu0 0
      %374 = vmatprep.subr.bf16.mxu0 0
      %375 = vmatpush1.bf16.msra.mxu0 0
      %376 = vmatprep.subr.bf16.mxu0 0
      %377 = vmatpush1.bf16.msra.mxu0 0
      %378 = vmatprep.subr.bf16.mxu0 0
      %379 = vmatpush1.bf16.msra.mxu0 0
      %380 = vmatprep.subr.bf16.mxu0 0
      %381 = vmatpush1.bf16.msra.mxu0 0
      %382 = vmatprep.subr.bf16.mxu0 0
      %383 = vmatpush1.bf16.msra.mxu0 0
      %384 = vmatprep.mubr.bf16.mxu0 0
      %385 = vmatmul.mubr.bf16.gmra.mrb[0].mxu0 %v288
      %v386 = vpop.f32.mrb[0].mxu0
      %v387 = vadd.f32 0.0, %v386
      %v388 = vpop.f32.mrb[0].mxu0
      %v389 = vpop.f32.mrb[0].mxu0
      %v390 = vadd.f32 0.0, %v389
      %v391 = vpop.f32.mrb[0].mxu0
      %392 = vmatprep.mubr.bf16.mxu0 0
      %393 = vmatmul.mubr.bf16.gmra.mrb[0].mxu0 %v289
      %v394 = vpop.f32.mrb[0].mxu0
      %v395 = vadd.f32 0.0, %v394
      %v396 = vpop.f32.mrb[0].mxu0
      %v397 = vpop.f32.mrb[0].mxu0
      %v398 = vadd.f32 0.0, %v397
      %v399 = vpop.f32.mrb[0].mxu0
      %400 = vmatprep.mubr.bf16.mxu0 0
      %401 = vmatmul.mubr.bf16.gmra.mrb[0].mxu0 %v290
      %v402 = vpop.f32.mrb[0].mxu0
      %v403 = vadd.f32 0.0, %v402
      %v404 = vpop.f32.mrb[0].mxu0
      %v405 = vpop.f32.mrb[0].mxu0
      %v406 = vadd.f32 0.0, %v405
      %v407 = vpop.f32.mrb[0].mxu0
      %408 = vmatprep.mubr.bf16.mxu0 0
      %409 = vmatmul.mubr.bf16.gmra.mrb[0].mxu0 %v291
      %v410 = vpop.f32.mrb[0].mxu0
      %v411 = vadd.f32 0.0, %v410
      %v412 = vpop.f32.mrb[0].mxu0
      %v413 = vpop.f32.mrb[0].mxu0
      %v414 = vadd.f32 0.0, %v413
      %v415 = vpop.f32.mrb[0].mxu0
      %416 = vmatprep.mubr.bf16.mxu0 0
      %417 = vmatmul.mubr.bf16.gmra.mrb[0].mxu0 %v292
      %v418 = vpop.f32.mrb[0].mxu0
      %v419 = vadd.f32 0.0, %v418
      %v420 = vpop.f32.mrb[0].mxu0
      %v421 = vpop.f32.mrb[0].mxu0
      %v422 = vadd.f32 0.0, %v421
      %v423 = vpop.f32.mrb[0].mxu0
      %424 = vmatprep.mubr.bf16.mxu0 0
      %425 = vmatmul.mubr.bf16.gmra.mrb[0].mxu0 %v293
      %v426 = vpop.f32.mrb[0].mxu0
      %v427 = vadd.f32 0.0, %v426
      %v428 = vpop.f32.mrb[0].mxu0
      %v429 = vpop.f32.mrb[0].mxu0
      %v430 = vadd.f32 0.0, %v429
      %v431 = vpop.f32.mrb[0].mxu0
      %432 = vmatprep.mubr.bf16.mxu0 0
      %433 = vmatmul.mubr.bf16.gmra.mrb[0].mxu0 %v294
      %v434 = vpop.f32.mrb[0].mxu0
      %v435 = vadd.f32 0.0, %v434
      %v436 = vpop.f32.mrb[0].mxu0
      %v437 = vpop.f32.mrb[0].mxu0
      %v438 = vadd.f32 0.0, %v437
      %v439 = vpop.f32.mrb[0].mxu0
      %440 = vmatprep.mubr.bf16.mxu0 0
      %441 = vmatmul.mubr.bf16.gmra.mrb[0].mxu0 %v295
      %v442 = vpop.f32.mrb[0].mxu0
      %v443 = vadd.f32 0.0, %v442
      %v444 = vpop.f32.mrb[0].mxu0
      %v445 = vpop.f32.mrb[0].mxu0
      %v446 = vadd.f32 0.0, %v445
      %v447 = vpop.f32.mrb[0].mxu0
      %448 = vdwg.mxu0
      %p449 = scmp.eq.s32.totalorder %s20, 0
      // Predicated region
      $region29: #{rgcn_two_layer_forward.4} parent=27 // pred_check
        %p450 = pneg %p449
      $region30: #{rgcn_two_layer_forward.4} parent=27 // pred_check_branch
        %452 = sbr.rel (%p450) target = $region32
      $region31: #{rgcn_two_layer_forward.4} parent=27 // pred_region
        %453 = vst [vmem:[#allocation2] sm:$0xff] %v387
        %454 = vst [vmem:[#allocation2 + $0x8] sm:$0xff] %v390
        %455 = vst [vmem:[#allocation2 + $0x10] sm:$0xff] %v395
        %456 = vst [vmem:[#allocation2 + $0x18] sm:$0xff] %v398
        %457 = vst [vmem:[#allocation2 + $0x20] sm:$0xff] %v403
        %458 = vst [vmem:[#allocation2 + $0x28] sm:$0xff] %v406
        %459 = vst [vmem:[#allocation2 + $0x30] sm:$0xff] %v411
        %460 = vst [vmem:[#allocation2 + $0x38] sm:$0xff] %v414
        %461 = vst [vmem:[#allocation2 + $0x40] sm:$0xff] %v419
        %462 = vst [vmem:[#allocation2 + $0x48] sm:$0xff] %v422
        %463 = vst [vmem:[#allocation2 + $0x50] sm:$0xff] %v427
        %464 = vst [vmem:[#allocation2 + $0x58] sm:$0xff] %v430
        %465 = vst [vmem:[#allocation2 + $0x60] sm:$0xff] %v435
        %466 = vst [vmem:[#allocation2 + $0x68] sm:$0xff] %v438
        %467 = vst [vmem:[#allocation2 + $0x70] sm:$0xff] %v443
        %468 = vst [vmem:[#allocation2 + $0x78] sm:$0xff] %v446
      $region32: #{rgcn_two_layer_forward.4} parent=27 // pred_fallthru
        _
      %p469 = scmp.gt.s32.totalorder %s20, 0
      // Predicated region
      $region33: #{rgcn_two_layer_forward.4} parent=27 // pred_check
        %p470 = pneg %p469
      $region34: #{rgcn_two_layer_forward.4} parent=27 // pred_check_branch
        %472 = sbr.rel (%p470) target = $region36
      $region35: #{rgcn_two_layer_forward.4} parent=27 // pred_region
        %v473 = vld [vmem:[#allocation2] sm:$0xff]
        %v474 = vld [vmem:[#allocation2 + $0x8] sm:$0xff]
        %v475 = vld [vmem:[#allocation2 + $0x10] sm:$0xff]
        %v476 = vld [vmem:[#allocation2 + $0x18] sm:$0xff]
        %v477 = vld [vmem:[#allocation2 + $0x20] sm:$0xff]
        %v478 = vld [vmem:[#allocation2 + $0x28] sm:$0xff]
        %v479 = vld [vmem:[#allocation2 + $0x30] sm:$0xff]
        %v480 = vld [vmem:[#allocation2 + $0x38] sm:$0xff]
        %v481 = vld [vmem:[#allocation2 + $0x40] sm:$0xff]
        %v482 = vld [vmem:[#allocation2 + $0x48] sm:$0xff]
        %v483 = vld [vmem:[#allocation2 + $0x50] sm:$0xff]
        %v484 = vld [vmem:[#allocation2 + $0x58] sm:$0xff]
        %v485 = vld [vmem:[#allocation2 + $0x60] sm:$0xff]
        %v486 = vld [vmem:[#allocation2 + $0x68] sm:$0xff]
        %v487 = vld [vmem:[#allocation2 + $0x70] sm:$0xff]
        %v488 = vld [vmem:[#allocation2 + $0x78] sm:$0xff]
        %v489 = vadd.f32 %v473, %v387
        %v490 = vadd.f32 %v474, %v390
        %v491 = vadd.f32 %v475, %v395
        %v492 = vadd.f32 %v476, %v398
        %v493 = vadd.f32 %v477, %v403
        %v494 = vadd.f32 %v478, %v406
        %v495 = vadd.f32 %v479, %v411
        %v496 = vadd.f32 %v480, %v414
        %v497 = vadd.f32 %v481, %v419
        %v498 = vadd.f32 %v482, %v422
        %v499 = vadd.f32 %v483, %v427
        %v500 = vadd.f32 %v484, %v430
        %v501 = vadd.f32 %v485, %v435
        %v502 = vadd.f32 %v486, %v438
        %v503 = vadd.f32 %v487, %v443
        %v504 = vadd.f32 %v488, %v446
        %505 = vst [vmem:[#allocation2] sm:$0xff] %v489
        %506 = vst [vmem:[#allocation2 + $0x8] sm:$0xff] %v490
        %507 = vst [vmem:[#allocation2 + $0x10] sm:$0xff] %v491
        %508 = vst [vmem:[#allocation2 + $0x18] sm:$0xff] %v492
        %509 = vst [vmem:[#allocation2 + $0x20] sm:$0xff] %v493
        %510 = vst [vmem:[#allocation2 + $0x28] sm:$0xff] %v494
        %511 = vst [vmem:[#allocation2 + $0x30] sm:$0xff] %v495
        %512 = vst [vmem:[#allocation2 + $0x38] sm:$0xff] %v496
        %513 = vst [vmem:[#allocation2 + $0x40] sm:$0xff] %v497
        %514 = vst [vmem:[#allocation2 + $0x48] sm:$0xff] %v498
        %515 = vst [vmem:[#allocation2 + $0x50] sm:$0xff] %v499
        %516 = vst [vmem:[#allocation2 + $0x58] sm:$0xff] %v500
        %517 = vst [vmem:[#allocation2 + $0x60] sm:$0xff] %v501
        %518 = vst [vmem:[#allocation2 + $0x68] sm:$0xff] %v502
        %519 = vst [vmem:[#allocation2 + $0x70] sm:$0xff] %v503
        %520 = vst [vmem:[#allocation2 + $0x78] sm:$0xff] %v504
      $region36: #{rgcn_two_layer_forward.4} parent=27 // pred_fallthru
        _
      // Predicated region
      $region37: #{rgcn_two_layer_forward.4} parent=27 // pred_check
        %p521 = pneg %p449
      $region38: #{rgcn_two_layer_forward.4} parent=27 // pred_check_branch
        %523 = sbr.rel (%p521) target = $region40
      $region39: #{rgcn_two_layer_forward.4} parent=27 // pred_region
        %v524 = vld [vmem:[#allocation2] sm:$0xff]
        %v525 = vld [vmem:[#allocation2 + $0x8] sm:$0xff]
        %v526 = vld [vmem:[#allocation2 + $0x10] sm:$0xff]
        %v527 = vld [vmem:[#allocation2 + $0x18] sm:$0xff]
        %v528 = vld [vmem:[#allocation2 + $0x20] sm:$0xff]
        %v529 = vld [vmem:[#allocation2 + $0x28] sm:$0xff]
        %v530 = vld [vmem:[#allocation2 + $0x30] sm:$0xff]
        %v531 = vld [vmem:[#allocation2 + $0x38] sm:$0xff]
        %v532 = vld [vmem:[#allocation2 + $0x40] sm:$0xff]
        %v533 = vld [vmem:[#allocation2 + $0x48] sm:$0xff]
        %v534 = vld [vmem:[#allocation2 + $0x50] sm:$0xff]
        %v535 = vld [vmem:[#allocation2 + $0x58] sm:$0xff]
        %v536 = vld [vmem:[#allocation2 + $0x60] sm:$0xff]
        %v537 = vld [vmem:[#allocation2 + $0x68] sm:$0xff]
        %v538 = vld [vmem:[#allocation2 + $0x70] sm:$0xff]
        %v539 = vld [vmem:[#allocation2 + $0x78] sm:$0xff]
        %v540 = vpack.c.bf16 %v525, %v524
        %v541 = vpack.c.bf16 %v527, %v526
        %v542 = vpack.c.bf16 %v529, %v528
        %v543 = vpack.c.bf16 %v531, %v530
        %v544 = vpack.c.bf16 %v533, %v532
        %v545 = vpack.c.bf16 %v535, %v534
        %v546 = vpack.c.bf16 %v537, %v536
        %v547 = vpack.c.bf16 %v539, %v538
        %v556 = vunpack.c.l.b16 %v540
        %v557 = vunpack.c.h.b16 %v540
        %v558 = vunpack.c.l.b16 %v541
        %v559 = vunpack.c.h.b16 %v541
        %v560 = vunpack.c.l.b16 %v542
        %v561 = vunpack.c.h.b16 %v542
        %v562 = vunpack.c.l.b16 %v543
        %v563 = vunpack.c.h.b16 %v543
        %v564 = vunpack.c.l.b16 %v544
        %v565 = vunpack.c.h.b16 %v544
        %v566 = vunpack.c.l.b16 %v545
        %v567 = vunpack.c.h.b16 %v545
        %v568 = vunpack.c.l.b16 %v546
        %v569 = vunpack.c.h.b16 %v546
        %v570 = vunpack.c.l.b16 %v547
        %v571 = vunpack.c.h.b16 %v547
        %v572 = vpack.c.b16 %v556, %v556
        %v573 = vpack.c.b16 %v557, %v557
        %v574 = vpack.c.b16 %v558, %v558
        %v575 = vpack.c.b16 %v559, %v559
        %v576 = vpack.c.b16 %v560, %v560
        %v577 = vpack.c.b16 %v561, %v561
        %v578 = vpack.c.b16 %v562, %v562
        %v579 = vpack.c.b16 %v563, %v563
        %v580 = vpack.c.b16 %v564, %v564
        %v581 = vpack.c.b16 %v565, %v565
        %v582 = vpack.c.b16 %v566, %v566
        %v583 = vpack.c.b16 %v567, %v567
        %v584 = vpack.c.b16 %v568, %v568
        %v585 = vpack.c.b16 %v569, %v569
        %v586 = vpack.c.b16 %v570, %v570
        %v587 = vpack.c.b16 %v571, %v571
        %604 = vst [vmem:[%s221] sm:$0xf] %v572
        %605 = vst [vmem:[%s221 + $0x4] sm:$0xf] %v573
        %606 = vst [vmem:[%s221 + $0x8] sm:$0xf] %v574
        %607 = vst [vmem:[%s221 + $0xc] sm:$0xf] %v575
        %608 = vst [vmem:[%s221 + $0x10] sm:$0xf] %v576
        %609 = vst [vmem:[%s221 + $0x14] sm:$0xf] %v577
        %610 = vst [vmem:[%s221 + $0x18] sm:$0xf] %v578
        %611 = vst [vmem:[%s221 + $0x1c] sm:$0xf] %v579
        %612 = vst [vmem:[%s221 + $0x20] sm:$0xf] %v580
        %613 = vst [vmem:[%s221 + $0x24] sm:$0xf] %v581
        %614 = vst [vmem:[%s221 + $0x28] sm:$0xf] %v582
        %615 = vst [vmem:[%s221 + $0x2c] sm:$0xf] %v583
        %616 = vst [vmem:[%s221 + $0x30] sm:$0xf] %v584
        %617 = vst [vmem:[%s221 + $0x34] sm:$0xf] %v585
        %618 = vst [vmem:[%s221 + $0x38] sm:$0xf] %v586
        %619 = vst [vmem:[%s221 + $0x3c] sm:$0xf] %v587
      $region40: #{rgcn_two_layer_forward.4} parent=27 // pred_fallthru
        _
      %s620 = smul.u32 16, %s19
      %p621 = scmp.lt.s32.totalorder %s18, 2
      %s622 = scalar_select %p621, %s18, 2
      %p623 = scmp.lt.s32.totalorder %s620, 15
      %s624 = scalar_select %p623, %s620, 15
      %s625 = smul.addr %s622, 16
      %s626 = sadd.s32 %s624, %s625
      %s627 = smul.addr %s626, 4
      %s628 = scalar_lea.vmem %s2, %s627
      // Predicated region
      $region41: #{rgcn_two_layer_forward.4} parent=27 // pred_check
        %p629 = pneg %p108
      $region42: #{rgcn_two_layer_forward.4} parent=27 // pred_check_branch
        %631 = sbr.rel (%p629) target = $region44
      $region43: #{rgcn_two_layer_forward.4} parent=27 // pred_region
        %s632 = smul.u32 16, %s19
      $region44: #{rgcn_two_layer_forward.4} parent=27 // pred_fallthru
        _
    $region28: #{rgcn_two_layer_forward.4} parent=5 // pred_fallthru
      _
    %p633 = scmp.le.s32.totalorder 2, %s8
    // Predicated region
    $region45: #{rgcn_two_layer_forward.4} parent=5 // pred_check
      %p634 = pneg %p633
    $region46: #{rgcn_two_layer_forward.4} parent=5 // pred_check_branch
      %636 = sbr.rel (%p634) target = $region48
    $region47: #{rgcn_two_layer_forward.4} parent=5 // pred_region
      %s637 = ssub.s32 %s8, 2
      // Predicated region
      $region49: #{rgcn_two_layer_forward.4} parent=47 // pred_check
        %p638 = pneg %p114
      $region50: #{rgcn_two_layer_forward.4} parent=47 // pred_check_branch
        %640 = sbr.rel (%p638) target = $region52
      $region51: #{rgcn_two_layer_forward.4} parent=47 // pred_region
        %s641 = smul.u32 16, %s22
        %p642 = scmp.lt.s32.totalorder %s21, 2
        %s643 = scalar_select %p642, %s21, 2
        %p644 = scmp.lt.s32.totalorder %s641, 15
        %s645 = scalar_select %p644, %s641, 15
        %s646 = smul.addr %s643, 16
        %s647 = sadd.s32 %s645, %s646
        %s648 = smul.addr %s647, 4
        %s649 = scalar_lea.vmem %s2, %s648
      $region52: #{rgcn_two_layer_forward.4} parent=47 // pred_fallthru
        _
    $region48: #{rgcn_two_layer_forward.4} parent=5 // pred_fallthru
      _
  $region6: #{rgcn_two_layer_forward.4} parent=0 // loop_footer
    %s12 = sadd.s32 1, %s8
  $region7: #{rgcn_two_layer_forward.4} parent=0 // loop_footer_branch
    %7 = sbr.rel target = $region3
  $region8: #{rgcn_two_layer_forward.4} parent=0 // loop_exit
    _

// kernel: rgcn_two_layer_forward.5
$region0: #{rgcn_two_layer_forward.5}
  #allocation0 [shape = 'u32[]', space=smem, size = 0x4, offset = 0x4, fixed_abs, tag = 'smem constant byte address 0x4 - core index']
  #allocation1 [shape = 'u32[144,128]{1,0:T(1,128)}', space=vmem, size = 0x12000, scoped, tag = 'internal scratch']
  #allocation2 [shape = 'f32[128,128]{1,0:T(8,128)}', space=vmem, size = 0x10000, scoped, tag = 'scratch operand']
  %s0 = inlined_call_operand.vmem [shape: bf16[3,128,128], index: 0, kind: input, shape index: {}]
  %s1 = inlined_call_operand.vmem [shape: bf16[3,128,128], index: 1, kind: input, shape index: {}]
  %s2 = inlined_call_operand.vmem [shape: bf16[128,128], index: 2, kind: output, shape index: {}]
  %s3 = sld [smem:[#allocation0]]
  $region53: #{rgcn_two_layer_forward.5} parent=0
    _
  %s5 = ssub.s32 1, %s3
  %s6 = scalar_select 0, %s5, %s3
  loop: start=0, step=1, limit=5
  $region2: #{rgcn_two_layer_forward.5} parent=0 // loop_pre_header
    _
  $region3: #{rgcn_two_layer_forward.5} parent=0 // loop_header
    %s8 = sphi 0, %s12
    %p9 = scmp.ge.s32.totalorder %s8, 5
    %s15 = sphi 0, %s34
    %s16 = sphi 0, %s30
    %s17 = sphi 0, %s26
    %s18 = sphi 0, %s15
    %s19 = sphi 0, %s16
    %s20 = sphi 0, %s17
    %s21 = sphi 0, %s18
    %s22 = sphi 0, %s19
    %s23 = sphi 0, %s20
    %s41 = sphi 0, %s43
    %s44 = sphi 0, %s41
    %s45 = sphi 0, %s44
    %s61 = sphi 0, %s45
    %s69 = sphi 0, %s71
    %s72 = sphi 0, %s69
    %s73 = sphi 0, %s72
    %s89 = sphi 0, %s73
    %s95 = sphi 0, %s97
    %s98 = sphi 0, %s95
    %s99 = sphi 0, %s98
    %s115 = sphi 0, %s99
  $region4: #{rgcn_two_layer_forward.5} parent=0 // loop_header_branch
    %11 = sbr.rel (%p9) target = $region8
  $region5: #{rgcn_two_layer_forward.5} parent=0 // loop_body
    %s13 = ssub.s32 %s8, 1
    %s14 = ssub.s32 %s8, 2
    %s24 = sadd.s32 1, %s17
    %p25 = scmp.ge.s32.totalorder %s24, 1
    %s26 = scalar_select %p25, 0, %s24
    %s27 = sadd.s32 1, %s16
    %s28 = scalar_select %p25, %s27, %s16
    %p29 = scmp.ge.s32.totalorder %s28, 3
    %s30 = scalar_select %p29, 0, %s28
    %s31 = sadd.s32 1, %s15
    %s32 = scalar_select %p29, %s31, %s15
    %p33 = scmp.ge.s32.totalorder %s32, 1
    %s34 = scalar_select %p33, 0, %s32
    %s35 = ssub.s32 %s16, %s30
    %s36 = ssub.s32 %s15, %s34
    %s37 = sor.u32 %s35, %s36
    %s38 = ssub.s32 %s17, %s26
    %s39 = sor.u32 %s37, %s38
    %p40 = scmp.eq.s32.totalorder %s39, 0
    %s42 = sadd.s32 %s41, 1
    %s43 = scalar_select %p40, %s41, %s42
    %p46 = pneg %p40
    %p47 = scmp.eq.s32.totalorder %s8, 2
    %p48 = por %p46, %p47
    %p49 = scmp.ne.s32.totalorder %s41, %s44
    %p50 = scmp.eq.s32.totalorder %s8, 0
    %p51 = por %p49, %p50
    %p52 = scmp.ne.s32.totalorder %s41, %s44
    %p53 = scmp.eq.s32.totalorder %s13, 2
    %p54 = por %p52, %p53
    %p55 = scmp.ne.s32.totalorder %s44, %s45
    %p56 = scmp.eq.s32.totalorder %s13, 0
    %p57 = por %p55, %p56
    %p58 = scmp.ne.s32.totalorder %s44, %s45
    %p59 = scmp.eq.s32.totalorder %s14, 2
    %p60 = por %p58, %p59
    %p62 = scmp.ne.s32.totalorder %s45, %s61
    %p63 = scmp.eq.s32.totalorder %s14, 0
    %p64 = por %p62, %p63
    %s65 = ssub.s32 %s16, %s30
    %s66 = ssub.s32 %s17, %s26
    %s67 = sor.u32 %s65, %s66
    %p68 = scmp.eq.s32.totalorder %s67, 0
    %s70 = sadd.s32 %s69, 1
    %s71 = scalar_select %p68, %s69, %s70
    %p74 = pneg %p68
    %p75 = scmp.eq.s32.totalorder %s8, 2
    %p76 = por %p74, %p75
    %p77 = scmp.ne.s32.totalorder %s69, %s72
    %p78 = scmp.eq.s32.totalorder %s8, 0
    %p79 = por %p77, %p78
    %p80 = scmp.ne.s32.totalorder %s69, %s72
    %p81 = scmp.eq.s32.totalorder %s13, 2
    %p82 = por %p80, %p81
    %p83 = scmp.ne.s32.totalorder %s72, %s73
    %p84 = scmp.eq.s32.totalorder %s13, 0
    %p85 = por %p83, %p84
    %p86 = scmp.ne.s32.totalorder %s72, %s73
    %p87 = scmp.eq.s32.totalorder %s14, 2
    %p88 = por %p86, %p87
    %p90 = scmp.ne.s32.totalorder %s73, %s89
    %p91 = scmp.eq.s32.totalorder %s14, 0
    %p92 = por %p90, %p91
    %s93 = ssub.s32 %s15, %s34
    %p94 = scmp.eq.s32.totalorder %s93, 0
    %s96 = sadd.s32 %s95, 1
    %s97 = scalar_select %p94, %s95, %s96
    %p100 = pneg %p94
    %p101 = scmp.eq.s32.totalorder %s8, 2
    %p102 = por %p100, %p101
    %p103 = scmp.ne.s32.totalorder %s95, %s98
    %p104 = scmp.eq.s32.totalorder %s8, 0
    %p105 = por %p103, %p104
    %p106 = scmp.ne.s32.totalorder %s95, %s98
    %p107 = scmp.eq.s32.totalorder %s13, 2
    %p108 = por %p106, %p107
    %p109 = scmp.ne.s32.totalorder %s98, %s99
    %p110 = scmp.eq.s32.totalorder %s13, 0
    %p111 = por %p109, %p110
    %p112 = scmp.ne.s32.totalorder %s98, %s99
    %p113 = scmp.eq.s32.totalorder %s14, 2
    %p114 = por %p112, %p113
    %p116 = scmp.ne.s32.totalorder %s99, %s115
    %p117 = scmp.eq.s32.totalorder %s14, 0
    %p118 = por %p116, %p117
    %p119 = scmp.le.s32.totalorder 1, %s8
    %p120 = scmp.lt.s32.totalorder %s8, 4
    %p121 = pnand %p119, %p120
    %p122 = pneg %p121
    // Predicated region
    $region9: #{rgcn_two_layer_forward.5} parent=5 // pred_check
      _
    $region10: #{rgcn_two_layer_forward.5} parent=5 // pred_check_branch
      %124 = sbr.rel (%p121) target = $region12
    $region11: #{rgcn_two_layer_forward.5} parent=5 // pred_region
      %s125 = ssub.s32 %s8, 1
    $region12: #{rgcn_two_layer_forward.5} parent=5 // pred_fallthru
      _
    %p126 = scmp.lt.s32.totalorder %s8, 3
    // Predicated region
    $region13: #{rgcn_two_layer_forward.5} parent=5 // pred_check
      %p127 = pneg %p126
    $region14: #{rgcn_two_layer_forward.5} parent=5 // pred_check_branch
      %129 = sbr.rel (%p127) target = $region16
    $region15: #{rgcn_two_layer_forward.5} parent=5 // pred_region
      // Predicated region
      $region17: #{rgcn_two_layer_forward.5} parent=15 // pred_check
        %p130 = pneg %p51
      $region18: #{rgcn_two_layer_forward.5} parent=15 // pred_check_branch
        %132 = sbr.rel (%p130) target = $region20
      $region19: #{rgcn_two_layer_forward.5} parent=15 // pred_region
        %s133 = smul.u32 16, %s15
        %p134 = scmp.lt.s32.totalorder %s16, 2
        %s135 = scalar_select %p134, %s16, 2
        %p136 = scmp.lt.s32.totalorder %s133, 15
        %s137 = scalar_select %p136, %s133, 15
        %p138 = scmp.lt.s32.totalorder %s17, 0
        %s139 = scalar_select %p138, %s17, 0
        %s140 = sadd.s32 %s139, %s137
        %s141 = smul.addr %s135, 16
        %s142 = sadd.s32 %s140, %s141
        %s143 = smul.addr %s142, 4
        %s144 = scalar_lea.vmem %s0, %s143
        %s145 = smul.u32 16, %s15
      $region20: #{rgcn_two_layer_forward.5} parent=15 // pred_fallthru
        _
      // Predicated region
      $region21: #{rgcn_two_layer_forward.5} parent=15 // pred_check
        %p146 = pneg %p79
      $region22: #{rgcn_two_layer_forward.5} parent=15 // pred_check_branch
        %148 = sbr.rel (%p146) target = $region24
      $region23: #{rgcn_two_layer_forward.5} parent=15 // pred_region
        %s149 = smul.u32 16, %s17
        %p150 = scmp.lt.s32.totalorder %s16, 2
        %s151 = scalar_select %p150, %s16, 2
        %p152 = scmp.lt.s32.totalorder %s149, 15
        %s153 = scalar_select %p152, %s149, 15
        %s154 = smul.addr %s151, 16
        %s155 = sadd.s32 %s153, %s154
        %s156 = smul.addr %s155, 4
        %s157 = scalar_lea.vmem %s1, %s156
        %s158 = smul.u32 16, %s17
      $region24: #{rgcn_two_layer_forward.5} parent=15 // pred_fallthru
        _
    $region16: #{rgcn_two_layer_forward.5} parent=5 // pred_fallthru
      _
    %p159 = scmp.le.s32.totalorder 1, %s8
    %p160 = scmp.lt.s32.totalorder %s8, 4
    %p161 = pnand %p159, %p160
    %p162 = pneg %p161
    // Predicated region
    $region25: #{rgcn_two_layer_forward.5} parent=5 // pred_check
      _
    $region26: #{rgcn_two_layer_forward.5} parent=5 // pred_check_branch
      %164 = sbr.rel (%p161) target = $region28
    $region27: #{rgcn_two_layer_forward.5} parent=5 // pred_region
      %s165 = ssub.s32 %s8, 1
      %s166 = smul.u32 16, %s18
      %p167 = scmp.lt.s32.totalorder %s19, 2
      %s168 = scalar_select %p167, %s19, 2
      %p169 = scmp.lt.s32.totalorder %s166, 15
      %s170 = scalar_select %p169, %s166, 15
      %p171 = scmp.lt.s32.totalorder %s20, 0
      %s172 = scalar_select %p171, %s20, 0
      %s173 = sadd.s32 %s172, %s170
      %s174 = smul.addr %s168, 16
      %s175 = sadd.s32 %s173, %s174
      %s176 = smul.addr %s175, 4
      %s177 = scalar_lea.vmem %s0, %s176
      %p178 = pneg %p57
      %p179 = pneg %p54
      %s180 = smul.u32 16, %s20
      %p181 = scmp.lt.s32.totalorder %s19, 2
      %s182 = scalar_select %p181, %s19, 2
      %p183 = scmp.lt.s32.totalorder %s180, 15
      %s184 = scalar_select %p183, %s180, 15
      %s185 = smul.addr %s182, 16
      %s186 = sadd.s32 %s184, %s185
      %s187 = smul.addr %s186, 4
      %s188 = scalar_lea.vmem %s1, %s187
      %p189 = pneg %p85
      %p190 = pneg %p82
      %p191 = pneg %p111
      %p192 = pneg %p108
      %s193 = smul.u32 16, %s18
      %p194 = scmp.lt.s32.totalorder %s193, 15
      %s195 = scalar_select %p194, %s193, 15
      %s196 = smul.addr %s195, 4
      %s197 = scalar_lea.vmem %s2, %s196
      %s198 = smul.u32 16, %s18
      %p199 = scmp.lt.s32.totalorder %s19, 2
      %s200 = scalar_select %p199, %s19, 2
      %p201 = scmp.lt.s32.totalorder %s198, 15
      %s202 = scalar_select %p201, %s198, 15
      %p203 = scmp.lt.s32.totalorder %s20, 0
      %s204 = scalar_select %p203, %s20, 0
      %s205 = sadd.s32 %s204, %s202
      %s206 = smul.addr %s200, 16
      %s207 = sadd.s32 %s205, %s206
      %s208 = smul.addr %s207, 4
      %s209 = scalar_lea.vmem %s0, %s208
      %s210 = smul.u32 16, %s18
      %s211 = smul.u32 16, %s20
      %p212 = scmp.lt.s32.totalorder %s19, 2
      %s213 = scalar_select %p212, %s19, 2
      %p214 = scmp.lt.s32.totalorder %s211, 15
      %s215 = scalar_select %p214, %s211, 15
      %s216 = smul.addr %s213, 16
      %s217 = sadd.s32 %s215, %s216
      %s218 = smul.addr %s217, 4
      %s219 = scalar_lea.vmem %s1, %s218
      %s220 = smul.u32 16, %s20
      %s221 = smul.u32 16, %s18
      %p222 = scmp.lt.s32.totalorder %s221, 15
      %s223 = scalar_select %p222, %s221, 15
      %s224 = smul.addr %s223, 4
      %s225 = scalar_lea.vmem %s2, %s224
      %s226 = smul.u32 16, %s18
      %p228 = scmp.eq.s32.totalorder %s19, 0
      %p229 = scmp.eq.s32.totalorder %s20, 0
      %p230 = pnand %p228, %p229
      %p231 = pneg %p230
      %p232 = scmp.eq.s32.totalorder %s19, 2
      %p233 = pnand %p232, %p229
      %p234 = pneg %p233
      %v235 = vld [vmem:[%s209] sm:$0xf]
      %v236 = vld [vmem:[%s209 + $0x4] sm:$0xf]
      %v237 = vld [vmem:[%s209 + $0x8] sm:$0xf]
      %v238 = vld [vmem:[%s209 + $0xc] sm:$0xf]
      %v239 = vld [vmem:[%s209 + $0x10] sm:$0xf]
      %v240 = vld [vmem:[%s209 + $0x14] sm:$0xf]
      %v241 = vld [vmem:[%s209 + $0x18] sm:$0xf]
      %v242 = vld [vmem:[%s209 + $0x1c] sm:$0xf]
      %v243 = vld [vmem:[%s209 + $0x20] sm:$0xf]
      %v244 = vld [vmem:[%s209 + $0x24] sm:$0xf]
      %v245 = vld [vmem:[%s209 + $0x28] sm:$0xf]
      %v246 = vld [vmem:[%s209 + $0x2c] sm:$0xf]
      %v247 = vld [vmem:[%s209 + $0x30] sm:$0xf]
      %v248 = vld [vmem:[%s209 + $0x34] sm:$0xf]
      %v249 = vld [vmem:[%s209 + $0x38] sm:$0xf]
      %v250 = vld [vmem:[%s209 + $0x3c] sm:$0xf]
      %v251 = vld [vmem:[%s219] sm:$0xf]
      %v252 = vld [vmem:[%s219 + $0x4] sm:$0xf]
      %v253 = vld [vmem:[%s219 + $0x8] sm:$0xf]
      %v254 = vld [vmem:[%s219 + $0xc] sm:$0xf]
      %v255 = vld [vmem:[%s219 + $0x10] sm:$0xf]
      %v256 = vld [vmem:[%s219 + $0x14] sm:$0xf]
      %v257 = vld [vmem:[%s219 + $0x18] sm:$0xf]
      %v258 = vld [vmem:[%s219 + $0x1c] sm:$0xf]
      %v259 = vld [vmem:[%s219 + $0x20] sm:$0xf]
      %v260 = vld [vmem:[%s219 + $0x24] sm:$0xf]
      %v261 = vld [vmem:[%s219 + $0x28] sm:$0xf]
      %v262 = vld [vmem:[%s219 + $0x2c] sm:$0xf]
      %v263 = vld [vmem:[%s219 + $0x30] sm:$0xf]
      %v264 = vld [vmem:[%s219 + $0x34] sm:$0xf]
      %v265 = vld [vmem:[%s219 + $0x38] sm:$0xf]
      %v266 = vld [vmem:[%s219 + $0x3c] sm:$0xf]
      %v283 = vunpack.c.l.b16 %v235
      %v284 = vunpack.c.l.b16 %v236
      %v285 = vunpack.c.l.b16 %v237
      %v286 = vunpack.c.l.b16 %v238
      %v287 = vunpack.c.l.b16 %v239
      %v288 = vunpack.c.l.b16 %v240
      %v289 = vunpack.c.l.b16 %v241
      %v290 = vunpack.c.l.b16 %v242
      %v291 = vunpack.c.l.b16 %v243
      %v292 = vunpack.c.l.b16 %v244
      %v293 = vunpack.c.l.b16 %v245
      %v294 = vunpack.c.l.b16 %v246
      %v295 = vunpack.c.l.b16 %v247
      %v296 = vunpack.c.l.b16 %v248
      %v297 = vunpack.c.l.b16 %v249
      %v298 = vunpack.c.l.b16 %v250
      %v299 = vpack.c.b16 %v284, %v283
      %v300 = vpack.c.b16 %v286, %v285
      %v301 = vpack.c.b16 %v288, %v287
      %v302 = vpack.c.b16 %v290, %v289
      %v303 = vpack.c.b16 %v292, %v291
      %v304 = vpack.c.b16 %v294, %v293
      %v305 = vpack.c.b16 %v296, %v295
      %v306 = vpack.c.b16 %v298, %v297
      %v331 = vunpack.c.l.b16 %v251
      %v332 = vunpack.c.l.b16 %v252
      %v333 = vunpack.c.l.b16 %v253
      %v334 = vunpack.c.l.b16 %v254
      %v335 = vunpack.c.l.b16 %v255
      %v336 = vunpack.c.l.b16 %v256
      %v337 = vunpack.c.l.b16 %v257
      %v338 = vunpack.c.l.b16 %v258
      %v339 = vunpack.c.l.b16 %v259
      %v340 = vunpack.c.l.b16 %v260
      %v341 = vunpack.c.l.b16 %v261
      %v342 = vunpack.c.l.b16 %v262
      %v343 = vunpack.c.l.b16 %v263
      %v344 = vunpack.c.l.b16 %v264
      %v345 = vunpack.c.l.b16 %v265
      %v346 = vunpack.c.l.b16 %v266
      %v347 = vpack.c.b16 %v332, %v331
      %v348 = vpack.c.b16 %v334, %v333
      %v349 = vpack.c.b16 %v336, %v335
      %v350 = vpack.c.b16 %v338, %v337
      %v351 = vpack.c.b16 %v340, %v339
      %v352 = vpack.c.b16 %v342, %v341
      %v353 = vpack.c.b16 %v344, %v343
      %v354 = vpack.c.b16 %v346, %v345
      %363 = vmatprep.subr.bf16.mxu0 0
      %364 = vmatpush1.bf16.msra.mxu0 %v347
      %365 = vmatprep.subr.bf16.mxu0 0
      %366 = vmatpush1.bf16.msra.mxu0 %v348
      %367 = vmatprep.subr.bf16.mxu0 0
      %368 = vmatpush1.bf16.msra.mxu0 %v349
      %369 = vmatprep.subr.bf16.mxu0 0
      %370 = vmatpush1.bf16.msra.mxu0 %v350
      %371 = vmatprep.subr.bf16.mxu0 0
      %372 = vmatpush1.bf16.msra.mxu0 %v351
      %373 = vmatprep.subr.bf16.mxu0 0
      %374 = vmatpush1.bf16.msra.mxu0 %v352
      %375 = vmatprep.subr.bf16.mxu0 0
      %376 = vmatpush1.bf16.msra.mxu0 %v353
      %377 = vmatprep.subr.bf16.mxu0 0
      %378 = vmatpush1.bf16.msra.mxu0 %v354
      %379 = vmatprep.subr.bf16.mxu0 0
      %380 = vmatpush1.bf16.msra.mxu0 0
      %381 = vmatprep.subr.bf16.mxu0 0
      %382 = vmatpush1.bf16.msra.mxu0 0
      %383 = vmatprep.subr.bf16.mxu0 0
      %384 = vmatpush1.bf16.msra.mxu0 0
      %385 = vmatprep.subr.bf16.mxu0 0
      %386 = vmatpush1.bf16.msra.mxu0 0
      %387 = vmatprep.subr.bf16.mxu0 0
      %388 = vmatpush1.bf16.msra.mxu0 0
      %389 = vmatprep.subr.bf16.mxu0 0
      %390 = vmatpush1.bf16.msra.mxu0 0
      %391 = vmatprep.subr.bf16.mxu0 0
      %392 = vmatpush1.bf16.msra.mxu0 0
      %393 = vmatprep.subr.bf16.mxu0 0
      %394 = vmatpush1.bf16.msra.mxu0 0
      %395 = vmatprep.mubr.bf16.mxu0 0
      %396 = vmatmul.mubr.bf16.gmra.mrb[0].mxu0 %v299
      %v397 = vpop.f32.mrb[0].mxu0
      %v398 = vadd.f32 0.0, %v397
      %v399 = vpop.f32.mrb[0].mxu0
      %v400 = vpop.f32.mrb[0].mxu0
      %v401 = vadd.f32 0.0, %v400
      %v402 = vpop.f32.mrb[0].mxu0
      %403 = vmatprep.mubr.bf16.mxu0 0
      %404 = vmatmul.mubr.bf16.gmra.mrb[0].mxu0 %v300
      %v405 = vpop.f32.mrb[0].mxu0
      %v406 = vadd.f32 0.0, %v405
      %v407 = vpop.f32.mrb[0].mxu0
      %v408 = vpop.f32.mrb[0].mxu0
      %v409 = vadd.f32 0.0, %v408
      %v410 = vpop.f32.mrb[0].mxu0
      %411 = vmatprep.mubr.bf16.mxu0 0
      %412 = vmatmul.mubr.bf16.gmra.mrb[0].mxu0 %v301
      %v413 = vpop.f32.mrb[0].mxu0
      %v414 = vadd.f32 0.0, %v413
      %v415 = vpop.f32.mrb[0].mxu0
      %v416 = vpop.f32.mrb[0].mxu0
      %v417 = vadd.f32 0.0, %v416
      %v418 = vpop.f32.mrb[0].mxu0
      %419 = vmatprep.mubr.bf16.mxu0 0
      %420 = vmatmul.mubr.bf16.gmra.mrb[0].mxu0 %v302
      %v421 = vpop.f32.mrb[0].mxu0
      %v422 = vadd.f32 0.0, %v421
      %v423 = vpop.f32.mrb[0].mxu0
      %v424 = vpop.f32.mrb[0].mxu0
      %v425 = vadd.f32 0.0, %v424
      %v426 = vpop.f32.mrb[0].mxu0
      %427 = vmatprep.mubr.bf16.mxu0 0
      %428 = vmatmul.mubr.bf16.gmra.mrb[0].mxu0 %v303
      %v429 = vpop.f32.mrb[0].mxu0
      %v430 = vadd.f32 0.0, %v429
      %v431 = vpop.f32.mrb[0].mxu0
      %v432 = vpop.f32.mrb[0].mxu0
      %v433 = vadd.f32 0.0, %v432
      %v434 = vpop.f32.mrb[0].mxu0
      %435 = vmatprep.mubr.bf16.mxu0 0
      %436 = vmatmul.mubr.bf16.gmra.mrb[0].mxu0 %v304
      %v437 = vpop.f32.mrb[0].mxu0
      %v438 = vadd.f32 0.0, %v437
      %v439 = vpop.f32.mrb[0].mxu0
      %v440 = vpop.f32.mrb[0].mxu0
      %v441 = vadd.f32 0.0, %v440
      %v442 = vpop.f32.mrb[0].mxu0
      %443 = vmatprep.mubr.bf16.mxu0 0
      %444 = vmatmul.mubr.bf16.gmra.mrb[0].mxu0 %v305
      %v445 = vpop.f32.mrb[0].mxu0
      %v446 = vadd.f32 0.0, %v445
      %v447 = vpop.f32.mrb[0].mxu0
      %v448 = vpop.f32.mrb[0].mxu0
      %v449 = vadd.f32 0.0, %v448
      %v450 = vpop.f32.mrb[0].mxu0
      %451 = vmatprep.mubr.bf16.mxu0 0
      %452 = vmatmul.mubr.bf16.gmra.mrb[0].mxu0 %v306
      %v453 = vpop.f32.mrb[0].mxu0
      %v454 = vadd.f32 0.0, %v453
      %v455 = vpop.f32.mrb[0].mxu0
      %v456 = vpop.f32.mrb[0].mxu0
      %v457 = vadd.f32 0.0, %v456
      %v458 = vpop.f32.mrb[0].mxu0
      %459 = vdwg.mxu0
      // Predicated region
      $region29: #{rgcn_two_layer_forward.5} parent=27 // pred_check
        _
      $region30: #{rgcn_two_layer_forward.5} parent=27 // pred_check_branch
        %461 = sbr.rel (%p230) target = $region32
      $region31: #{rgcn_two_layer_forward.5} parent=27 // pred_region
        %462 = vst [vmem:[#allocation2] sm:$0xff] %v398
        %463 = vst [vmem:[#allocation2 + $0x8] sm:$0xff] %v401
        %464 = vst [vmem:[#allocation2 + $0x10] sm:$0xff] %v406
        %465 = vst [vmem:[#allocation2 + $0x18] sm:$0xff] %v409
        %466 = vst [vmem:[#allocation2 + $0x20] sm:$0xff] %v414
        %467 = vst [vmem:[#allocation2 + $0x28] sm:$0xff] %v417
        %468 = vst [vmem:[#allocation2 + $0x30] sm:$0xff] %v422
        %469 = vst [vmem:[#allocation2 + $0x38] sm:$0xff] %v425
        %470 = vst [vmem:[#allocation2 + $0x40] sm:$0xff] %v430
        %471 = vst [vmem:[#allocation2 + $0x48] sm:$0xff] %v433
        %472 = vst [vmem:[#allocation2 + $0x50] sm:$0xff] %v438
        %473 = vst [vmem:[#allocation2 + $0x58] sm:$0xff] %v441
        %474 = vst [vmem:[#allocation2 + $0x60] sm:$0xff] %v446
        %475 = vst [vmem:[#allocation2 + $0x68] sm:$0xff] %v449
        %476 = vst [vmem:[#allocation2 + $0x70] sm:$0xff] %v454
        %477 = vst [vmem:[#allocation2 + $0x78] sm:$0xff] %v457
      $region32: #{rgcn_two_layer_forward.5} parent=27 // pred_fallthru
        _
      %p478 = pneg %p231
      // Predicated region
      $region33: #{rgcn_two_layer_forward.5} parent=27 // pred_check
        _
      $region34: #{rgcn_two_layer_forward.5} parent=27 // pred_check_branch
        %480 = sbr.rel (%p231) target = $region36
      $region35: #{rgcn_two_layer_forward.5} parent=27 // pred_region
        %v481 = vld [vmem:[#allocation2] sm:$0xff]
        %v482 = vld [vmem:[#allocation2 + $0x8] sm:$0xff]
        %v483 = vld [vmem:[#allocation2 + $0x10] sm:$0xff]
        %v484 = vld [vmem:[#allocation2 + $0x18] sm:$0xff]
        %v485 = vld [vmem:[#allocation2 + $0x20] sm:$0xff]
        %v486 = vld [vmem:[#allocation2 + $0x28] sm:$0xff]
        %v487 = vld [vmem:[#allocation2 + $0x30] sm:$0xff]
        %v488 = vld [vmem:[#allocation2 + $0x38] sm:$0xff]
        %v489 = vld [vmem:[#allocation2 + $0x40] sm:$0xff]
        %v490 = vld [vmem:[#allocation2 + $0x48] sm:$0xff]
        %v491 = vld [vmem:[#allocation2 + $0x50] sm:$0xff]
        %v492 = vld [vmem:[#allocation2 + $0x58] sm:$0xff]
        %v493 = vld [vmem:[#allocation2 + $0x60] sm:$0xff]
        %v494 = vld [vmem:[#allocation2 + $0x68] sm:$0xff]
        %v495 = vld [vmem:[#allocation2 + $0x70] sm:$0xff]
        %v496 = vld [vmem:[#allocation2 + $0x78] sm:$0xff]
        %v497 = vadd.f32 %v481, %v398
        %v498 = vadd.f32 %v482, %v401
        %v499 = vadd.f32 %v483, %v406
        %v500 = vadd.f32 %v484, %v409
        %v501 = vadd.f32 %v485, %v414
        %v502 = vadd.f32 %v486, %v417
        %v503 = vadd.f32 %v487, %v422
        %v504 = vadd.f32 %v488, %v425
        %v505 = vadd.f32 %v489, %v430
        %v506 = vadd.f32 %v490, %v433
        %v507 = vadd.f32 %v491, %v438
        %v508 = vadd.f32 %v492, %v441
        %v509 = vadd.f32 %v493, %v446
        %v510 = vadd.f32 %v494, %v449
        %v511 = vadd.f32 %v495, %v454
        %v512 = vadd.f32 %v496, %v457
        %513 = vst [vmem:[#allocation2] sm:$0xff] %v497
        %514 = vst [vmem:[#allocation2 + $0x8] sm:$0xff] %v498
        %515 = vst [vmem:[#allocation2 + $0x10] sm:$0xff] %v499
        %516 = vst [vmem:[#allocation2 + $0x18] sm:$0xff] %v500
        %517 = vst [vmem:[#allocation2 + $0x20] sm:$0xff] %v501
        %518 = vst [vmem:[#allocation2 + $0x28] sm:$0xff] %v502
        %519 = vst [vmem:[#allocation2 + $0x30] sm:$0xff] %v503
        %520 = vst [vmem:[#allocation2 + $0x38] sm:$0xff] %v504
        %521 = vst [vmem:[#allocation2 + $0x40] sm:$0xff] %v505
        %522 = vst [vmem:[#allocation2 + $0x48] sm:$0xff] %v506
        %523 = vst [vmem:[#allocation2 + $0x50] sm:$0xff] %v507
        %524 = vst [vmem:[#allocation2 + $0x58] sm:$0xff] %v508
        %525 = vst [vmem:[#allocation2 + $0x60] sm:$0xff] %v509
        %526 = vst [vmem:[#allocation2 + $0x68] sm:$0xff] %v510
        %527 = vst [vmem:[#allocation2 + $0x70] sm:$0xff] %v511
        %528 = vst [vmem:[#allocation2 + $0x78] sm:$0xff] %v512
      $region36: #{rgcn_two_layer_forward.5} parent=27 // pred_fallthru
        _
      // Predicated region
      $region37: #{rgcn_two_layer_forward.5} parent=27 // pred_check
        _
      $region38: #{rgcn_two_layer_forward.5} parent=27 // pred_check_branch
        %530 = sbr.rel (%p233) target = $region40
      $region39: #{rgcn_two_layer_forward.5} parent=27 // pred_region
        %v531 = vld [vmem:[#allocation2] sm:$0xff]
        %v532 = vld [vmem:[#allocation2 + $0x8] sm:$0xff]
        %v533 = vld [vmem:[#allocation2 + $0x10] sm:$0xff]
        %v534 = vld [vmem:[#allocation2 + $0x18] sm:$0xff]
        %v535 = vld [vmem:[#allocation2 + $0x20] sm:$0xff]
        %v536 = vld [vmem:[#allocation2 + $0x28] sm:$0xff]
        %v537 = vld [vmem:[#allocation2 + $0x30] sm:$0xff]
        %v538 = vld [vmem:[#allocation2 + $0x38] sm:$0xff]
        %v539 = vld [vmem:[#allocation2 + $0x40] sm:$0xff]
        %v540 = vld [vmem:[#allocation2 + $0x48] sm:$0xff]
        %v541 = vld [vmem:[#allocation2 + $0x50] sm:$0xff]
        %v542 = vld [vmem:[#allocation2 + $0x58] sm:$0xff]
        %v543 = vld [vmem:[#allocation2 + $0x60] sm:$0xff]
        %v544 = vld [vmem:[#allocation2 + $0x68] sm:$0xff]
        %v545 = vld [vmem:[#allocation2 + $0x70] sm:$0xff]
        %v546 = vld [vmem:[#allocation2 + $0x78] sm:$0xff]
        %v547 = vmax.f32 %v531, 0.0
        %v548 = vmax.f32 %v532, 0.0
        %v549 = vmax.f32 %v533, 0.0
        %v550 = vmax.f32 %v534, 0.0
        %v551 = vmax.f32 %v535, 0.0
        %v552 = vmax.f32 %v536, 0.0
        %v553 = vmax.f32 %v537, 0.0
        %v554 = vmax.f32 %v538, 0.0
        %v555 = vmax.f32 %v539, 0.0
        %v556 = vmax.f32 %v540, 0.0
        %v557 = vmax.f32 %v541, 0.0
        %v558 = vmax.f32 %v542, 0.0
        %v559 = vmax.f32 %v543, 0.0
        %v560 = vmax.f32 %v544, 0.0
        %v561 = vmax.f32 %v545, 0.0
        %v562 = vmax.f32 %v546, 0.0
        %v563 = vpack.c.bf16 %v548, %v547
        %v564 = vpack.c.bf16 %v550, %v549
        %v565 = vpack.c.bf16 %v552, %v551
        %v566 = vpack.c.bf16 %v554, %v553
        %v567 = vpack.c.bf16 %v556, %v555
        %v568 = vpack.c.bf16 %v558, %v557
        %v569 = vpack.c.bf16 %v560, %v559
        %v570 = vpack.c.bf16 %v562, %v561
        %v579 = vunpack.c.l.b16 %v563
        %v580 = vunpack.c.h.b16 %v563
        %v581 = vunpack.c.l.b16 %v564
        %v582 = vunpack.c.h.b16 %v564
        %v583 = vunpack.c.l.b16 %v565
        %v584 = vunpack.c.h.b16 %v565
        %v585 = vunpack.c.l.b16 %v566
        %v586 = vunpack.c.h.b16 %v566
        %v587 = vunpack.c.l.b16 %v567
        %v588 = vunpack.c.h.b16 %v567
        %v589 = vunpack.c.l.b16 %v568
        %v590 = vunpack.c.h.b16 %v568
        %v591 = vunpack.c.l.b16 %v569
        %v592 = vunpack.c.h.b16 %v569
        %v593 = vunpack.c.l.b16 %v570
        %v594 = vunpack.c.h.b16 %v570
        %v595 = vpack.c.b16 %v579, %v579
        %v596 = vpack.c.b16 %v580, %v580
        %v597 = vpack.c.b16 %v581, %v581
        %v598 = vpack.c.b16 %v582, %v582
        %v599 = vpack.c.b16 %v583, %v583
        %v600 = vpack.c.b16 %v584, %v584
        %v601 = vpack.c.b16 %v585, %v585
        %v602 = vpack.c.b16 %v586, %v586
        %v603 = vpack.c.b16 %v587, %v587
        %v604 = vpack.c.b16 %v588, %v588
        %v605 = vpack.c.b16 %v589, %v589
        %v606 = vpack.c.b16 %v590, %v590
        %v607 = vpack.c.b16 %v591, %v591
        %v608 = vpack.c.b16 %v592, %v592
        %v609 = vpack.c.b16 %v593, %v593
        %v610 = vpack.c.b16 %v594, %v594
        %627 = vst [vmem:[%s225] sm:$0xf] %v595
        %628 = vst [vmem:[%s225 + $0x4] sm:$0xf] %v596
        %629 = vst [vmem:[%s225 + $0x8] sm:$0xf] %v597
        %630 = vst [vmem:[%s225 + $0xc] sm:$0xf] %v598
        %631 = vst [vmem:[%s225 + $0x10] sm:$0xf] %v599
        %632 = vst [vmem:[%s225 + $0x14] sm:$0xf] %v600
        %633 = vst [vmem:[%s225 + $0x18] sm:$0xf] %v601
        %634 = vst [vmem:[%s225 + $0x1c] sm:$0xf] %v602
        %635 = vst [vmem:[%s225 + $0x20] sm:$0xf] %v603
        %636 = vst [vmem:[%s225 + $0x24] sm:$0xf] %v604
        %637 = vst [vmem:[%s225 + $0x28] sm:$0xf] %v605
        %638 = vst [vmem:[%s225 + $0x2c] sm:$0xf] %v606
        %639 = vst [vmem:[%s225 + $0x30] sm:$0xf] %v607
        %640 = vst [vmem:[%s225 + $0x34] sm:$0xf] %v608
        %641 = vst [vmem:[%s225 + $0x38] sm:$0xf] %v609
        %642 = vst [vmem:[%s225 + $0x3c] sm:$0xf] %v610
      $region40: #{rgcn_two_layer_forward.5} parent=27 // pred_fallthru
        _
      %s643 = smul.u32 16, %s18
      %p644 = scmp.lt.s32.totalorder %s643, 15
      %s645 = scalar_select %p644, %s643, 15
      %s646 = smul.addr %s645, 4
      %s647 = scalar_lea.vmem %s2, %s646
      // Predicated region
      $region41: #{rgcn_two_layer_forward.5} parent=27 // pred_check
        %p648 = pneg %p108
      $region42: #{rgcn_two_layer_forward.5} parent=27 // pred_check_branch
        %650 = sbr.rel (%p648) target = $region44
      $region43: #{rgcn_two_layer_forward.5} parent=27 // pred_region
        %s651 = smul.u32 16, %s18
      $region44: #{rgcn_two_layer_forward.5} parent=27 // pred_fallthru
        _
      // Predicated region
      $region45: #{rgcn_two_layer_forward.5} parent=27 // pred_check
        %p652 = pneg %p108
      $region46: #{rgcn_two_layer_forward.5} parent=27 // pred_check_branch
        %654 = sbr.rel (%p652) target = $region48
      $region47: #{rgcn_two_layer_forward.5} parent=27 // pred_region
        %s655 = smul.u32 16, %s18
        %p656 = scmp.lt.s32.totalorder %s655, 15
        %s657 = scalar_select %p656, %s655, 15
        %s658 = smul.addr %s657, 4
        %s659 = scalar_lea.vmem %s2, %s658
      $region48: #{rgcn_two_layer_forward.5} parent=27 // pred_fallthru
        _
    $region28: #{rgcn_two_layer_forward.5} parent=5 // pred_fallthru
      _
    %p660 = scmp.le.s32.totalorder 2, %s8
    // Predicated region
    $region49: #{rgcn_two_layer_forward.5} parent=5 // pred_check
      %p661 = pneg %p660
    $region50: #{rgcn_two_layer_forward.5} parent=5 // pred_check_branch
      %663 = sbr.rel (%p661) target = $region52
    $region51: #{rgcn_two_layer_forward.5} parent=5 // pred_region
      %s664 = ssub.s32 %s8, 2
    $region52: #{rgcn_two_layer_forward.5} parent=5 // pred_fallthru
      _
  $region6: #{rgcn_two_layer_forward.5} parent=0 // loop_footer
    %s12 = sadd.s32 1, %s8
  $region7: #{rgcn_two_layer_forward.5} parent=0 // loop_footer_branch
    %7 = sbr.rel target = $region3
  $region8: #{rgcn_two_layer_forward.5} parent=0 // loop_exit
    _

</llo_original>
